<compile_context>
chip_gen: v7x
topology: tpu7x:2x2x1
jax: 0.10.0
libtpu: 0.0.40
codegen_flags: <defaults>
</compile_context>

<pallas_src>
import math
import functools

import jax
import jax.numpy as jnp
from jax.experimental import pallas as pl
from jax.experimental.pallas import tpu as pltpu


def _egattn_kernel(x_res_ref, x_mm_ref, wq_ref, wkv_ref, bq_ref, bkv_ref,
                   wo_ref, bo_ref, gamma_ref, beta_ref, o_ref, acc_ref, *,
                   eps, heads_per_group, head_dim, num_groups, q_tile,
                   mxu_dtype, exp_dtype):
    g = pl.program_id(2)
    qi = pl.program_id(1)
    G, d = heads_per_group, head_dim
    S = x_mm_ref.shape[1]

    # x was cast to the MXU dtype once in the wrapper -- no per-step cast sweep.
    x_kv = x_mm_ref[0]                                        # (S, H)
    if q_tile == S:
        x_q = x_kv
    else:
        q_start = pl.multiple_of(qi * q_tile, q_tile)
        x_q = x_mm_ref[0, pl.ds(q_start, q_tile), :]          # (tq, H)

    # Fused, lane-dense per-group projections.
    #   q_all:  (tq, G*d)   (1/sqrt(d) folded into wq/bq in the wrapper)
    #   kv_all: (S, 2*G*d)  = [ k_group | v_group ]
    q_all = jnp.dot(x_q, wq_ref[0], preferred_element_type=jnp.float32) + bq_ref[0]
    kv_all = jnp.dot(x_kv, wkv_ref[0], preferred_element_type=jnp.float32) + bkv_ref[0]

    ctx_heads = []
    for h in range(G):                                        # short unrolled loop
        q_h = q_all[:, h * d:(h + 1) * d].astype(mxu_dtype)            # (tq, d)
        k_h = kv_all[:, h * d:(h + 1) * d].astype(mxu_dtype)           # (S, d)
        v_h = kv_all[:, G * d + h * d:G * d + (h + 1) * d].astype(mxu_dtype)

        # (tq, S) scores: contract the d axis of q and k directly.
        s = jax.lax.dot_general(q_h, k_h,
                                dimension_numbers=(((1,), (1,)), ((), ())),
                                preferred_element_type=jnp.float32)
        s = s - jnp.max(s, axis=-1, keepdims=True)
        # exp in bf16 on v6e/v7x (bf16 EUP), f32 on v5e.
        p = jnp.exp(s.astype(exp_dtype))
        # Denominator always accumulated in f32.
        denom = jnp.sum(p.astype(jnp.float32), axis=-1, keepdims=True)
        ctx = jnp.dot(p.astype(mxu_dtype), v_h, preferred_element_type=jnp.float32)
        # Normalize the small (tq, d) context, not the (tq, S) probabilities.
        # NOTE: approx reciprocal + bf16 MXU operands -> inference-grade accuracy.
        ctx = ctx * pl.reciprocal(denom, approx=True)
        ctx_heads.append(ctx.astype(mxu_dtype))

    ctx_cat = ctx_heads[0] if G == 1 else jnp.concatenate(ctx_heads, axis=-1)

    # One lane-dense output-projection matmul for the whole group.
    group_out = jnp.dot(ctx_cat, wo_ref[0], preferred_element_type=jnp.float32)

    if num_groups > 1:
        @pl.when(g == 0)
        def _():
            acc_ref[...] = group_out

        @pl.when(jnp.logical_and(g > 0, g < num_groups - 1))
        def _():
            acc_ref[...] += group_out

    def _finalize():
        # Last group's contribution feeds finalize directly (no acc round-trip).
        attn = group_out if num_groups == 1 else acc_ref[...] + group_out
        y = x_res_ref[0].astype(jnp.float32) + attn + bo_ref[...]
        mean = jnp.mean(y, axis=-1, keepdims=True)
        var = jnp.mean((y - mean) ** 2, axis=-1, keepdims=True)
        y_hat = (y - mean) * jax.lax.rsqrt(var + eps)
        o_ref[0] = (y_hat * gamma_ref[...] + beta_ref[...]).astype(o_ref.dtype)

    if num_groups == 1:
        _finalize()
    else:
        pl.when(g == num_groups - 1)(_finalize)


def _device_kind():
    try:
        return jax.devices()[0].device_kind.lower()
    except Exception:
        return ""


def _vmem_physical_bytes(kind):
    try:
        return int(pltpu.get_tpu_info().vmem_capacity_bytes)
    except Exception:
        pass
    if any(tag in kind for tag in ("v5", "v6")):
        return 128 * 1024 * 1024
    return 64 * 1024 * 1024          # v7x and unknown generations: conservative


def _exp_supports_bf16(kind):
    # bf16 EUP path exists on v6e/v7x; v5e and older have no bf16 EUP/VPU.
    return not any(tag in kind for tag in ("v2", "v3", "v4", "v5"))


def entropy_guided_attention(x, in_proj_weight, in_proj_bias,
                             out_proj_weight, out_proj_bias, gamma, beta, *,
                             num_heads, eps=1e-6, mxu_dtype=jnp.bfloat16,
                             heads_per_group=None, q_tile=None):
    """x: (B, S, H). PyTorch-convention weights. Returns (B, S, H)."""
    B, S, H = x.shape
    assert H % num_heads == 0
    d = H // num_heads
    scale = 1.0 / math.sqrt(d)

    kind = _device_kind()
    exp_dtype = (mxu_dtype if (_exp_supports_bf16(kind) and mxu_dtype == jnp.bfloat16)
                 else jnp.float32)
    vmem_phys = _vmem_physical_bytes(kind)

    # ---- head batching: G heads per step so projections are MXU/lane dense. ----
    if heads_per_group is None:
        G = num_heads
        for cand in range(1, num_heads + 1):
            if num_heads % cand == 0 and cand * d >= 128:
                G = cand
                break
    else:
        G = heads_per_group
        assert num_heads % G == 0
    ng = num_heads // G
    Gd = G * d

    x_bpe = jnp.dtype(x.dtype).itemsize
    exp_bpe = jnp.dtype(exp_dtype).itemsize
    mxu_bpe = jnp.dtype(mxu_dtype).itemsize

    def est_vmem(tq):
        return int(
            2 * S * H * mxu_bpe                        # x (mxu copy), double-buffered
            + 2 * tq * H * x_bpe                       # residual tile
            + 2 * tq * H * x_bpe                       # output block
            + tq * H * 4                               # accumulator scratch
            + tq * H * 4                               # group_out
            + 2 * (3 * H * Gd + Gd * H) * mxu_bpe      # group weights, double-buffered
            + tq * Gd * (4 + mxu_bpe)                  # q_all (f32 + mxu slices)
            + S * 2 * Gd * (4 + mxu_bpe)               # kv_all (f32 + mxu slices)
            + 2 * tq * S * (4 + exp_bpe + mxu_bpe)     # scores + exp(P) (+ mxu P)
            + tq * Gd * (4 + mxu_bpe))                 # per-group context

    # ---- q-row tiling: full-S blocks when they fit, otherwise tile query rows
    #      (shrinks score blocks to (tq, S) and adds a second parallel axis). ----
    if q_tile is None:
        tq = S
        budget = int(0.7 * vmem_phys)
        while est_vmem(tq) > budget:
            nt = tq // 2
            if nt < 16 or S % nt != 0 or nt % 16 != 0:
                break
            tq = nt
    else:
        tq = q_tile
        assert tq == S or (S % tq == 0 and tq % 16 == 0)
    num_q_tiles = S // tq

    # ---- weight prep (constant-folded under jit): per-group stacked, transposed,
    #      1/sqrt(d) folded into q, stored in the MXU dtype. ----
    w_q = in_proj_weight[0:H].T              # (H_in, H_out), outputs head-ordered
    w_k = in_proj_weight[H:2 * H].T
    w_v = in_proj_weight[2 * H:3 * H].T

    def group_cols(w):                       # (H, H) -> (ng, H, Gd)
        return w.reshape(H, ng, Gd).transpose(1, 0, 2)

    wq_g = (group_cols(w_q) * scale).astype(mxu_dtype)                  # (ng, H, Gd)
    wkv_g = jnp.concatenate([group_cols(w_k), group_cols(w_v)],
                            axis=-1).astype(mxu_dtype)                  # (ng, H, 2Gd)

    b_q = in_proj_bias[0:H]
    b_k = in_proj_bias[H:2 * H]
    b_v = in_proj_bias[2 * H:3 * H]
    bq_g = (b_q * scale).reshape(ng, 1, Gd).astype(jnp.float32)
    bkv_g = jnp.concatenate([b_k.reshape(ng, 1, Gd), b_v.reshape(ng, 1, Gd)],
                            axis=-1).astype(jnp.float32)                # (ng, 1, 2Gd)

    # out = concat_h(ctx_h) @ W_o.T + b_o == sum_g ctx_g @ W_o.T[group-g rows] + b_o
    wo_g = out_proj_weight.T.reshape(ng, Gd, H).astype(mxu_dtype)       # (ng, Gd, H)
    bo2 = out_proj_bias.reshape(1, H).astype(jnp.float32)
    gamma2 = gamma.reshape(1, H).astype(jnp.float32)
    beta2 = beta.reshape(1, H).astype(jnp.float32)

    x_mm = x.astype(mxu_dtype)               # cast once here, never in the kernel

    kernel = functools.partial(
        _egattn_kernel, eps=eps, heads_per_group=G, head_dim=d, num_groups=ng,
        q_tile=tq, mxu_dtype=mxu_dtype, exp_dtype=exp_dtype)

    # Generation-aware VMEM limit with headroom below physical.
    cap = min(vmem_phys - 8 * 1024 * 1024, 110 * 1024 * 1024)
    vmem_limit = int(min(max(int(est_vmem(tq) * 1.25), 32 * 1024 * 1024), cap))

    grid = (B, num_q_tiles, ng)

    return pl.pallas_call(
        kernel,
        out_shape=jax.ShapeDtypeStruct((B, S, H), x.dtype),
        grid_spec=pltpu.PrefetchScalarGridSpec(
            num_scalar_prefetch=0,
            grid=grid,
            in_specs=[
                pl.BlockSpec((1, tq, H), lambda b, qi, g: (b, qi, 0)),      # x (residual)
                pl.BlockSpec((1, S, H), lambda b, qi, g: (b, 0, 0)),        # x (mxu copy)
                pl.BlockSpec((1, H, Gd), lambda b, qi, g: (g, 0, 0)),       # wq group
                pl.BlockSpec((1, H, 2 * Gd), lambda b, qi, g: (g, 0, 0)),   # wkv group
                pl.BlockSpec((1, 1, Gd), lambda b, qi, g: (g, 0, 0)),       # bq group
                pl.BlockSpec((1, 1, 2 * Gd), lambda b, qi, g: (g, 0, 0)),   # bkv group
                pl.BlockSpec((1, Gd, H), lambda b, qi, g: (g, 0, 0)),       # wo group
                pl.BlockSpec((1, H), lambda b, qi, g: (0, 0)),              # b_o
                pl.BlockSpec((1, H), lambda b, qi, g: (0, 0)),              # gamma
                pl.BlockSpec((1, H), lambda b, qi, g: (0, 0)),              # beta
            ],
            out_specs=pl.BlockSpec((1, tq, H), lambda b, qi, g: (b, qi, 0)),
            scratch_shapes=[pltpu.VMEM((tq, H), jnp.float32)],
        ),
        compiler_params=pltpu.CompilerParams(
            dimension_semantics=("parallel", "parallel", "arbitrary"),
            vmem_limit_bytes=vmem_limit),
    )(x, x_mm, wq_g, wkv_g, bq_g, bkv_g, wo_g, bo2, gamma2, beta2)


def _reference(x, w_in, b_in, w_out, b_out, gamma, beta, *, num_heads, eps=1e-6):
    """Plain-JAX f32 reference matching PyTorch nn.MultiheadAttention (eval)."""
    B, S, H = x.shape
    d = H // num_heads
    qkv = jnp.einsum("bsh,oh->bso", x, w_in) + b_in
    q, k, v = jnp.split(qkv, 3, axis=-1)
    q = q.reshape(B, S, num_heads, d).transpose(0, 2, 1, 3) / math.sqrt(d)
    k = k.reshape(B, S, num_heads, d).transpose(0, 2, 1, 3)
    v = v.reshape(B, S, num_heads, d).transpose(0, 2, 1, 3)
    s = jnp.einsum("bhqd,bhkd->bhqk", q, k)
    p = jax.nn.softmax(s, axis=-1)
    o = jnp.einsum("bhqk,bhkd->bhqd", p, v).transpose(0, 2, 1, 3).reshape(B, S, H)
    o = jnp.einsum("bsh,oh->bso", o, w_out) + b_out
    y = x + o
    mu = y.mean(-1, keepdims=True)
    var = ((y - mu) ** 2).mean(-1, keepdims=True)
    return (y - mu) * jax.lax.rsqrt(var + eps) * gamma + beta


if __name__ == "__main__":
    B, S, H, num_heads = 2, 8, 32, 4

    key = jax.random.PRNGKey(0)
    kx, kwi, kbi, kwo, kbo, kg, kb = jax.random.split(key, 7)

    x = jax.random.normal(kx, (B, S, H), dtype=jnp.float32)
    w_in = jax.random.normal(kwi, (3 * H, H), dtype=jnp.float32) * 0.05
    b_in = jax.random.normal(kbi, (3 * H,), dtype=jnp.float32) * 0.01
    w_out = jax.random.normal(kwo, (H, H), dtype=jnp.float32) * 0.05
    b_out = jax.random.normal(kbo, (H,), dtype=jnp.float32) * 0.01
    gamma = 1.0 + 0.1 * jax.random.normal(kg, (H,), dtype=jnp.float32)
    beta = 0.1 * jax.random.normal(kb, (H,), dtype=jnp.float32)

    out = entropy_guided_attention(x, w_in, b_in, w_out, b_out, gamma, beta,
                                   num_heads=num_heads)
    out = jax.block_until_ready(out)

    ref = _reference(x, w_in, b_in, w_out, b_out, gamma, beta,
                     num_heads=num_heads)
    assert out.shape == (B, S, H)
    # bf16 MXU operands, (possibly) bf16 exp, approx softmax reciprocal.
    max_err = float(jnp.max(jnp.abs(out - ref)))
    assert jnp.allclose(out, ref, atol=2e-2, rtol=2e-2), max_err

    print("KERNEL_OK")
</pallas_src>

<mosaic_0001>
module attributes {stable_mosaic.version = 11 : i64} {
  func.func @_egattn_kernel(%arg0: i32, %arg1: i32, %arg2: i32, %arg3: memref<1x8x32xf32, #tpu.memory_space<vmem>>, %arg4: memref<1x8x32xbf16, #tpu.memory_space<vmem>>, %arg5: memref<1x32x32xbf16, #tpu.memory_space<vmem>>, %arg6: memref<1x32x64xbf16, #tpu.memory_space<vmem>>, %arg7: memref<1x1x32xf32, #tpu.memory_space<vmem>>, %arg8: memref<1x1x64xf32, #tpu.memory_space<vmem>>, %arg9: memref<1x32x32xbf16, #tpu.memory_space<vmem>>, %arg10: memref<1x32xf32, #tpu.memory_space<vmem>>, %arg11: memref<1x32xf32, #tpu.memory_space<vmem>>, %arg12: memref<1x32xf32, #tpu.memory_space<vmem>>, %arg13: memref<1x8x32xf32, #tpu.memory_space<vmem>>, %arg14: memref<8x32xf32, #tpu.memory_space<vmem>>) attributes {dimension_semantics = [#tpu.dimension_semantics<parallel>, #tpu.dimension_semantics<parallel>, #tpu.dimension_semantics<arbitrary>], iteration_bounds = array<i64: 2, 1, 1>, scalar_prefetch = 0 : i64, scratch_operands = 1 : i64, tpu.core_type = #tpu.core_type<tc>, window_params = [{transform_indices = @transform_0, window_bounds = array<i64: 1, 8, 32>}, {transform_indices = @transform_1, window_bounds = array<i64: 1, 8, 32>}, {transform_indices = @transform_2, window_bounds = array<i64: 1, 32, 32>}, {transform_indices = @transform_3, window_bounds = array<i64: 1, 32, 64>}, {transform_indices = @transform_4, window_bounds = array<i64: 1, 1, 32>}, {transform_indices = @transform_5, window_bounds = array<i64: 1, 1, 64>}, {transform_indices = @transform_6, window_bounds = array<i64: 1, 32, 32>}, {pipeline_mode = #tpu.pipeline_mode<synchronous>, transform_indices = @transform_7, window_bounds = array<i64: 1, 32>}, {pipeline_mode = #tpu.pipeline_mode<synchronous>, transform_indices = @transform_8, window_bounds = array<i64: 1, 32>}, {pipeline_mode = #tpu.pipeline_mode<synchronous>, transform_indices = @transform_9, window_bounds = array<i64: 1, 32>}, {transform_indices = @transform_10, window_bounds = array<i64: 1, 8, 32>}]} {
    %c0 = arith.constant 0 : index
    %c0_0 = arith.constant 0 : index
    %c0_1 = arith.constant 0 : index
    %0 = vector.load %arg4[%c0, %c0_0, %c0_1] : memref<1x8x32xbf16, #tpu.memory_space<vmem>>, vector<1x8x32xbf16>
    %1 = vector.shape_cast %0 : vector<1x8x32xbf16> to vector<8x32xbf16>
    %c0_2 = arith.constant 0 : index
    %c0_3 = arith.constant 0 : index
    %c0_4 = arith.constant 0 : index
    %2 = vector.load %arg5[%c0_2, %c0_3, %c0_4] : memref<1x32x32xbf16, #tpu.memory_space<vmem>>, vector<1x32x32xbf16>
    %3 = vector.shape_cast %2 : vector<1x32x32xbf16> to vector<32x32xbf16>
    %cst = arith.constant dense<0.000000e+00> : vector<8x32xf32>
    %4 = tpu.matmul %1, %3, %cst {dimension_numbers = #tpu.dot_dimension_numbers<[1], [0], [0], [1], [0, 0, 1, 1], [], []>} : vector<8x32xbf16>, vector<32x32xbf16>, vector<8x32xf32> -> vector<8x32xf32>
    %c0_5 = arith.constant 0 : index
    %c0_6 = arith.constant 0 : index
    %c0_7 = arith.constant 0 : index
    %5 = vector.load %arg7[%c0_5, %c0_6, %c0_7] : memref<1x1x32xf32, #tpu.memory_space<vmem>>, vector<1x1x32xf32>
    %6 = vector.shape_cast %5 : vector<1x1x32xf32> to vector<1x32xf32>
    %7 = vector.broadcast %6 : vector<1x32xf32> to vector<8x32xf32>
    %8 = arith.addf %4, %7 : vector<8x32xf32>
    %c0_8 = arith.constant 0 : index
    %c0_9 = arith.constant 0 : index
    %c0_10 = arith.constant 0 : index
    %9 = vector.load %arg6[%c0_8, %c0_9, %c0_10] : memref<1x32x64xbf16, #tpu.memory_space<vmem>>, vector<1x32x64xbf16>
    %10 = vector.shape_cast %9 : vector<1x32x64xbf16> to vector<32x64xbf16>
    %cst_11 = arith.constant dense<0.000000e+00> : vector<8x64xf32>
    %11 = tpu.matmul %1, %10, %cst_11 {dimension_numbers = #tpu.dot_dimension_numbers<[1], [0], [0], [1], [0, 0, 1, 1], [], []>} : vector<8x32xbf16>, vector<32x64xbf16>, vector<8x64xf32> -> vector<8x64xf32>
    %c0_12 = arith.constant 0 : index
    %c0_13 = arith.constant 0 : index
    %c0_14 = arith.constant 0 : index
    %12 = vector.load %arg8[%c0_12, %c0_13, %c0_14] : memref<1x1x64xf32, #tpu.memory_space<vmem>>, vector<1x1x64xf32>
    %13 = vector.shape_cast %12 : vector<1x1x64xf32> to vector<1x64xf32>
    %14 = vector.broadcast %13 : vector<1x64xf32> to vector<8x64xf32>
    %15 = arith.addf %11, %14 : vector<8x64xf32>
    %16 = vector.extract_strided_slice %8 {offsets = [0, 0], sizes = [8, 8], strides = [1, 1]} : vector<8x32xf32> to vector<8x8xf32>
    %17 = arith.truncf %16 : vector<8x8xf32> to vector<8x8xbf16>
    %18 = vector.extract_strided_slice %15 {offsets = [0, 0], sizes = [8, 8], strides = [1, 1]} : vector<8x64xf32> to vector<8x8xf32>
    %19 = arith.truncf %18 : vector<8x8xf32> to vector<8x8xbf16>
    %20 = vector.extract_strided_slice %15 {offsets = [0, 32], sizes = [8, 8], strides = [1, 1]} : vector<8x64xf32> to vector<8x8xf32>
    %21 = arith.truncf %20 : vector<8x8xf32> to vector<8x8xbf16>
    %cst_15 = arith.constant dense<0.000000e+00> : vector<8x8xf32>
    %22 = tpu.matmul %17, %19, %cst_15 {dimension_numbers = #tpu.dot_dimension_numbers<[1], [1], [0], [0], [0, 0, 1, 0], [], []>} : vector<8x8xbf16>, vector<8x8xbf16>, vector<8x8xf32> -> vector<8x8xf32>
    %cst_16 = arith.constant dense<0xFF800000> : vector<8xf32>
    %23 = vector.multi_reduction <maximumf>, %22, %cst_16 [1] : vector<8x8xf32> to vector<8xf32>
    %24 = vector.shape_cast %23 : vector<8xf32> to vector<8x1xf32>
    %25 = vector.broadcast %24 : vector<8x1xf32> to vector<8x8xf32>
    %26 = arith.subf %22, %25 : vector<8x8xf32>
    %27 = arith.truncf %26 : vector<8x8xf32> to vector<8x8xbf16>
    %28 = math.exp %27 : vector<8x8xbf16>
    %29 = arith.extf %28 : vector<8x8xbf16> to vector<8x8xf32>
    %cst_17 = arith.constant dense<0.000000e+00> : vector<8xf32>
    %30 = vector.multi_reduction <add>, %29, %cst_17 [1] : vector<8x8xf32> to vector<8xf32>
    %31 = vector.shape_cast %30 : vector<8xf32> to vector<8x1xf32>
    %cst_18 = arith.constant dense<0.000000e+00> : vector<8x8xf32>
    %32 = tpu.matmul %28, %21, %cst_18 {dimension_numbers = #tpu.dot_dimension_numbers<[1], [0], [0], [1], [0, 0, 1, 1], [], []>} : vector<8x8xbf16>, vector<8x8xbf16>, vector<8x8xf32> -> vector<8x8xf32>
    %33 = tpu.reciprocal %31 {approx = true} : vector<8x1xf32> -> vector<8x1xf32>
    %34 = vector.broadcast %33 : vector<8x1xf32> to vector<8x8xf32>
    %35 = arith.mulf %32, %34 : vector<8x8xf32>
    %36 = arith.truncf %35 : vector<8x8xf32> to vector<8x8xbf16>
    %37 = vector.extract_strided_slice %8 {offsets = [0, 8], sizes = [8, 8], strides = [1, 1]} : vector<8x32xf32> to vector<8x8xf32>
    %38 = arith.truncf %37 : vector<8x8xf32> to vector<8x8xbf16>
    %39 = vector.extract_strided_slice %15 {offsets = [0, 8], sizes = [8, 8], strides = [1, 1]} : vector<8x64xf32> to vector<8x8xf32>
    %40 = arith.truncf %39 : vector<8x8xf32> to vector<8x8xbf16>
    %41 = vector.extract_strided_slice %15 {offsets = [0, 40], sizes = [8, 8], strides = [1, 1]} : vector<8x64xf32> to vector<8x8xf32>
    %42 = arith.truncf %41 : vector<8x8xf32> to vector<8x8xbf16>
    %cst_19 = arith.constant dense<0.000000e+00> : vector<8x8xf32>
    %43 = tpu.matmul %38, %40, %cst_19 {dimension_numbers = #tpu.dot_dimension_numbers<[1], [1], [0], [0], [0, 0, 1, 0], [], []>} : vector<8x8xbf16>, vector<8x8xbf16>, vector<8x8xf32> -> vector<8x8xf32>
    %cst_20 = arith.constant dense<0xFF800000> : vector<8xf32>
    %44 = vector.multi_reduction <maximumf>, %43, %cst_20 [1] : vector<8x8xf32> to vector<8xf32>
    %45 = vector.shape_cast %44 : vector<8xf32> to vector<8x1xf32>
    %46 = vector.broadcast %45 : vector<8x1xf32> to vector<8x8xf32>
    %47 = arith.subf %43, %46 : vector<8x8xf32>
    %48 = arith.truncf %47 : vector<8x8xf32> to vector<8x8xbf16>
    %49 = math.exp %48 : vector<8x8xbf16>
    %50 = arith.extf %49 : vector<8x8xbf16> to vector<8x8xf32>
    %cst_21 = arith.constant dense<0.000000e+00> : vector<8xf32>
    %51 = vector.multi_reduction <add>, %50, %cst_21 [1] : vector<8x8xf32> to vector<8xf32>
    %52 = vector.shape_cast %51 : vector<8xf32> to vector<8x1xf32>
    %cst_22 = arith.constant dense<0.000000e+00> : vector<8x8xf32>
    %53 = tpu.matmul %49, %42, %cst_22 {dimension_numbers = #tpu.dot_dimension_numbers<[1], [0], [0], [1], [0, 0, 1, 1], [], []>} : vector<8x8xbf16>, vector<8x8xbf16>, vector<8x8xf32> -> vector<8x8xf32>
    %54 = tpu.reciprocal %52 {approx = true} : vector<8x1xf32> -> vector<8x1xf32>
    %55 = vector.broadcast %54 : vector<8x1xf32> to vector<8x8xf32>
    %56 = arith.mulf %53, %55 : vector<8x8xf32>
    %57 = arith.truncf %56 : vector<8x8xf32> to vector<8x8xbf16>
    %58 = vector.extract_strided_slice %8 {offsets = [0, 16], sizes = [8, 8], strides = [1, 1]} : vector<8x32xf32> to vector<8x8xf32>
    %59 = arith.truncf %58 : vector<8x8xf32> to vector<8x8xbf16>
    %60 = vector.extract_strided_slice %15 {offsets = [0, 16], sizes = [8, 8], strides = [1, 1]} : vector<8x64xf32> to vector<8x8xf32>
    %61 = arith.truncf %60 : vector<8x8xf32> to vector<8x8xbf16>
    %62 = vector.extract_strided_slice %15 {offsets = [0, 48], sizes = [8, 8], strides = [1, 1]} : vector<8x64xf32> to vector<8x8xf32>
    %63 = arith.truncf %62 : vector<8x8xf32> to vector<8x8xbf16>
    %cst_23 = arith.constant dense<0.000000e+00> : vector<8x8xf32>
    %64 = tpu.matmul %59, %61, %cst_23 {dimension_numbers = #tpu.dot_dimension_numbers<[1], [1], [0], [0], [0, 0, 1, 0], [], []>} : vector<8x8xbf16>, vector<8x8xbf16>, vector<8x8xf32> -> vector<8x8xf32>
    %cst_24 = arith.constant dense<0xFF800000> : vector<8xf32>
    %65 = vector.multi_reduction <maximumf>, %64, %cst_24 [1] : vector<8x8xf32> to vector<8xf32>
    %66 = vector.shape_cast %65 : vector<8xf32> to vector<8x1xf32>
    %67 = vector.broadcast %66 : vector<8x1xf32> to vector<8x8xf32>
    %68 = arith.subf %64, %67 : vector<8x8xf32>
    %69 = arith.truncf %68 : vector<8x8xf32> to vector<8x8xbf16>
    %70 = math.exp %69 : vector<8x8xbf16>
    %71 = arith.extf %70 : vector<8x8xbf16> to vector<8x8xf32>
    %cst_25 = arith.constant dense<0.000000e+00> : vector<8xf32>
    %72 = vector.multi_reduction <add>, %71, %cst_25 [1] : vector<8x8xf32> to vector<8xf32>
    %73 = vector.shape_cast %72 : vector<8xf32> to vector<8x1xf32>
    %cst_26 = arith.constant dense<0.000000e+00> : vector<8x8xf32>
    %74 = tpu.matmul %70, %63, %cst_26 {dimension_numbers = #tpu.dot_dimension_numbers<[1], [0], [0], [1], [0, 0, 1, 1], [], []>} : vector<8x8xbf16>, vector<8x8xbf16>, vector<8x8xf32> -> vector<8x8xf32>
    %75 = tpu.reciprocal %73 {approx = true} : vector<8x1xf32> -> vector<8x1xf32>
    %76 = vector.broadcast %75 : vector<8x1xf32> to vector<8x8xf32>
    %77 = arith.mulf %74, %76 : vector<8x8xf32>
    %78 = arith.truncf %77 : vector<8x8xf32> to vector<8x8xbf16>
    %79 = vector.extract_strided_slice %8 {offsets = [0, 24], sizes = [8, 8], strides = [1, 1]} : vector<8x32xf32> to vector<8x8xf32>
    %80 = arith.truncf %79 : vector<8x8xf32> to vector<8x8xbf16>
    %81 = vector.extract_strided_slice %15 {offsets = [0, 24], sizes = [8, 8], strides = [1, 1]} : vector<8x64xf32> to vector<8x8xf32>
    %82 = arith.truncf %81 : vector<8x8xf32> to vector<8x8xbf16>
    %83 = vector.extract_strided_slice %15 {offsets = [0, 56], sizes = [8, 8], strides = [1, 1]} : vector<8x64xf32> to vector<8x8xf32>
    %84 = arith.truncf %83 : vector<8x8xf32> to vector<8x8xbf16>
    %cst_27 = arith.constant dense<0.000000e+00> : vector<8x8xf32>
    %85 = tpu.matmul %80, %82, %cst_27 {dimension_numbers = #tpu.dot_dimension_numbers<[1], [1], [0], [0], [0, 0, 1, 0], [], []>} : vector<8x8xbf16>, vector<8x8xbf16>, vector<8x8xf32> -> vector<8x8xf32>
    %cst_28 = arith.constant dense<0xFF800000> : vector<8xf32>
    %86 = vector.multi_reduction <maximumf>, %85, %cst_28 [1] : vector<8x8xf32> to vector<8xf32>
    %87 = vector.shape_cast %86 : vector<8xf32> to vector<8x1xf32>
    %88 = vector.broadcast %87 : vector<8x1xf32> to vector<8x8xf32>
    %89 = arith.subf %85, %88 : vector<8x8xf32>
    %90 = arith.truncf %89 : vector<8x8xf32> to vector<8x8xbf16>
    %91 = math.exp %90 : vector<8x8xbf16>
    %92 = arith.extf %91 : vector<8x8xbf16> to vector<8x8xf32>
    %cst_29 = arith.constant dense<0.000000e+00> : vector<8xf32>
    %93 = vector.multi_reduction <add>, %92, %cst_29 [1] : vector<8x8xf32> to vector<8xf32>
    %94 = vector.shape_cast %93 : vector<8xf32> to vector<8x1xf32>
    %cst_30 = arith.constant dense<0.000000e+00> : vector<8x8xf32>
    %95 = tpu.matmul %91, %84, %cst_30 {dimension_numbers = #tpu.dot_dimension_numbers<[1], [0], [0], [1], [0, 0, 1, 1], [], []>} : vector<8x8xbf16>, vector<8x8xbf16>, vector<8x8xf32> -> vector<8x8xf32>
    %96 = tpu.reciprocal %94 {approx = true} : vector<8x1xf32> -> vector<8x1xf32>
    %97 = vector.broadcast %96 : vector<8x1xf32> to vector<8x8xf32>
    %98 = arith.mulf %95, %97 : vector<8x8xf32>
    %99 = arith.truncf %98 : vector<8x8xf32> to vector<8x8xbf16>
    %100 = tpu.concatenate %36, %57, %78, %99 in 1 : vector<8x8xbf16>, vector<8x8xbf16>, vector<8x8xbf16>, vector<8x8xbf16> -> vector<8x32xbf16>
    %c0_31 = arith.constant 0 : index
    %c0_32 = arith.constant 0 : index
    %c0_33 = arith.constant 0 : index
    %101 = vector.load %arg9[%c0_31, %c0_32, %c0_33] : memref<1x32x32xbf16, #tpu.memory_space<vmem>>, vector<1x32x32xbf16>
    %102 = vector.shape_cast %101 : vector<1x32x32xbf16> to vector<32x32xbf16>
    %cst_34 = arith.constant dense<0.000000e+00> : vector<8x32xf32>
    %103 = tpu.matmul %100, %102, %cst_34 {dimension_numbers = #tpu.dot_dimension_numbers<[1], [0], [0], [1], [0, 0, 1, 1], [], []>} : vector<8x32xbf16>, vector<32x32xbf16>, vector<8x32xf32> -> vector<8x32xf32>
    %c0_35 = arith.constant 0 : index
    %c0_36 = arith.constant 0 : index
    %c0_37 = arith.constant 0 : index
    %104 = vector.load %arg3[%c0_35, %c0_36, %c0_37] : memref<1x8x32xf32, #tpu.memory_space<vmem>>, vector<1x8x32xf32>
    %105 = vector.shape_cast %104 : vector<1x8x32xf32> to vector<8x32xf32>
    %106 = arith.addf %105, %103 : vector<8x32xf32>
    %c0_38 = arith.constant 0 : index
    %c0_39 = arith.constant 0 : index
    %107 = vector.load %arg10[%c0_38, %c0_39] : memref<1x32xf32, #tpu.memory_space<vmem>>, vector<1x32xf32>
    %108 = vector.broadcast %107 : vector<1x32xf32> to vector<8x32xf32>
    %109 = arith.addf %106, %108 : vector<8x32xf32>
    %cst_40 = arith.constant dense<0.000000e+00> : vector<8xf32>
    %110 = vector.multi_reduction <add>, %109, %cst_40 [1] : vector<8x32xf32> to vector<8xf32>
    %111 = vector.shape_cast %110 : vector<8xf32> to vector<8x1xf32>
    %cst_41 = arith.constant 3.200000e+01 : f32
    %112 = vector.broadcast %cst_41 : f32 to vector<8x1xf32>
    %113 = arith.divf %111, %112 : vector<8x1xf32>
    %114 = vector.broadcast %113 : vector<8x1xf32> to vector<8x32xf32>
    %115 = arith.subf %109, %114 : vector<8x32xf32>
    %116 = arith.mulf %115, %115 : vector<8x32xf32>
    %cst_42 = arith.constant dense<0.000000e+00> : vector<8xf32>
    %117 = vector.multi_reduction <add>, %116, %cst_42 [1] : vector<8x32xf32> to vector<8xf32>
    %118 = vector.shape_cast %117 : vector<8xf32> to vector<8x1xf32>
    %cst_43 = arith.constant 3.200000e+01 : f32
    %119 = vector.broadcast %cst_43 : f32 to vector<8x1xf32>
    %120 = arith.divf %118, %119 : vector<8x1xf32>
    %121 = vector.broadcast %113 : vector<8x1xf32> to vector<8x32xf32>
    %122 = arith.subf %109, %121 : vector<8x32xf32>
    %cst_44 = arith.constant 9.99999997E-7 : f32
    %123 = vector.broadcast %cst_44 : f32 to vector<8x1xf32>
    %124 = arith.addf %120, %123 : vector<8x1xf32>
    %125 = math.rsqrt %124 : vector<8x1xf32>
    %126 = vector.broadcast %125 : vector<8x1xf32> to vector<8x32xf32>
    %127 = arith.mulf %122, %126 : vector<8x32xf32>
    %c0_45 = arith.constant 0 : index
    %c0_46 = arith.constant 0 : index
    %128 = vector.load %arg11[%c0_45, %c0_46] : memref<1x32xf32, #tpu.memory_space<vmem>>, vector<1x32xf32>
    %129 = vector.broadcast %128 : vector<1x32xf32> to vector<8x32xf32>
    %130 = arith.mulf %127, %129 : vector<8x32xf32>
    %c0_47 = arith.constant 0 : index
    %c0_48 = arith.constant 0 : index
    %131 = vector.load %arg12[%c0_47, %c0_48] : memref<1x32xf32, #tpu.memory_space<vmem>>, vector<1x32xf32>
    %132 = vector.broadcast %131 : vector<1x32xf32> to vector<8x32xf32>
    %133 = arith.addf %130, %132 : vector<8x32xf32>
    %c0_49 = arith.constant 0 : index
    %c0_50 = arith.constant 0 : index
    %c0_51 = arith.constant 0 : index
    %134 = vector.load %arg13[%c0_49, %c0_50, %c0_51] : memref<1x8x32xf32, #tpu.memory_space<vmem>>, vector<1x8x32xf32>
    %135 = vector.shape_cast %134 : vector<1x8x32xf32> to vector<8x32xf32>
    %136 = vector.shape_cast %133 : vector<8x32xf32> to vector<1x8x32xf32>
    tpu.vector_store %arg13[%c0_49, %c0_50, %c0_51], %136 {strides = array<i32>} : memref<1x8x32xf32, #tpu.memory_space<vmem>>, vector<1x8x32xf32>,
    return
  }
  func.func @transform_0(%arg0: i32, %arg1: i32, %arg2: i32) -> (i32, i32, i32) {
    %c0_i32 = arith.constant 0 : i32
    %c0_i32_0 = arith.constant 0 : i32
    return %arg0, %arg1, %c0_i32 : i32, i32, i32
  }
  func.func @transform_1(%arg0: i32, %arg1: i32, %arg2: i32) -> (i32, i32, i32) {
    %c0_i32 = arith.constant 0 : i32
    %c0_i32_0 = arith.constant 0 : i32
    %c0_i32_1 = arith.constant 0 : i32
    return %arg0, %c0_i32, %c0_i32_0 : i32, i32, i32
  }
  func.func @transform_2(%arg0: i32, %arg1: i32, %arg2: i32) -> (i32, i32, i32) {
    %c0_i32 = arith.constant 0 : i32
    %c0_i32_0 = arith.constant 0 : i32
    %c0_i32_1 = arith.constant 0 : i32
    return %arg2, %c0_i32, %c0_i32_0 : i32, i32, i32
  }
  func.func @transform_3(%arg0: i32, %arg1: i32, %arg2: i32) -> (i32, i32, i32) {
    %c0_i32 = arith.constant 0 : i32
    %c0_i32_0 = arith.constant 0 : i32
    %c0_i32_1 = arith.constant 0 : i32
    return %arg2, %c0_i32, %c0_i32_0 : i32, i32, i32
  }
  func.func @transform_4(%arg0: i32, %arg1: i32, %arg2: i32) -> (i32, i32, i32) {
    %c0_i32 = arith.constant 0 : i32
    %c0_i32_0 = arith.constant 0 : i32
    %c0_i32_1 = arith.constant 0 : i32
    return %arg2, %c0_i32, %c0_i32_0 : i32, i32, i32
  }
  func.func @transform_5(%arg0: i32, %arg1: i32, %arg2: i32) -> (i32, i32, i32) {
    %c0_i32 = arith.constant 0 : i32
    %c0_i32_0 = arith.constant 0 : i32
    %c0_i32_1 = arith.constant 0 : i32
    return %arg2, %c0_i32, %c0_i32_0 : i32, i32, i32
  }
  func.func @transform_6(%arg0: i32, %arg1: i32, %arg2: i32) -> (i32, i32, i32) {
    %c0_i32 = arith.constant 0 : i32
    %c0_i32_0 = arith.constant 0 : i32
    %c0_i32_1 = arith.constant 0 : i32
    return %arg2, %c0_i32, %c0_i32_0 : i32, i32, i32
  }
  func.func @transform_7(%arg0: i32, %arg1: i32, %arg2: i32) -> (i32, i32) {
    %c0_i32 = arith.constant 0 : i32
    %c0_i32_0 = arith.constant 0 : i32
    %c0_i32_1 = arith.constant 0 : i32
    return %c0_i32, %c0_i32_0 : i32, i32
  }
  func.func @transform_8(%arg0: i32, %arg1: i32, %arg2: i32) -> (i32, i32) {
    %c0_i32 = arith.constant 0 : i32
    %c0_i32_0 = arith.constant 0 : i32
    %c0_i32_1 = arith.constant 0 : i32
    return %c0_i32, %c0_i32_0 : i32, i32
  }
  func.func @transform_9(%arg0: i32, %arg1: i32, %arg2: i32) -> (i32, i32) {
    %c0_i32 = arith.constant 0 : i32
    %c0_i32_0 = arith.constant 0 : i32
    %c0_i32_1 = arith.constant 0 : i32
    return %c0_i32, %c0_i32_0 : i32, i32
  }
  func.func @transform_10(%arg0: i32, %arg1: i32, %arg2: i32) -> (i32, i32, i32) {
    %c0_i32 = arith.constant 0 : i32
    %c0_i32_0 = arith.constant 0 : i32
    return %arg0, %arg1, %c0_i32 : i32, i32, i32
  }
}

</mosaic_0001>

<llo_original>
// kernel: tpu_custom_call.1
$region0: #{tpu_custom_call.1}
  #allocation0 [shape = 'u32[]', space=smem, size = 0x4, offset = 0x4, fixed_abs, tag = 'smem constant byte address 0x4 - core index']
  #allocation1 [shape = 'u32[144,128]{1,0:T(1,128)}', space=vmem, size = 0x12000, scoped, tag = 'internal scratch']
  #allocation2 [shape = 'f32[8,32]{1,0:T(8,128)}', space=vmem, size = 0x1000, scoped, tag = 'scratch operand']
  %s0 = inlined_call_operand.hbm [shape: f32[2,8,32], index: 0, kind: input, shape index: {}]
  %s1 = inlined_call_operand.hbm [shape: bf16[2,8,32], index: 1, kind: input, shape index: {}]
  %s2 = inlined_call_operand.hbm [shape: bf16[1,32,32], index: 2, kind: input, shape index: {}]
  %s3 = inlined_call_operand.hbm [shape: bf16[1,32,64], index: 3, kind: input, shape index: {}]
  %s4 = inlined_call_operand.vmem [shape: f32[1,1,32], index: 4, kind: input, shape index: {}]
  %s5 = inlined_call_operand.vmem [shape: f32[1,1,64], index: 5, kind: input, shape index: {}]
  %s6 = inlined_call_operand.vmem [shape: bf16[1,32,32], index: 6, kind: input, shape index: {}]
  %s7 = inlined_call_operand.vmem [shape: f32[1,32], index: 7, kind: input, shape index: {}]
  %s8 = inlined_call_operand.vmem [shape: f32[1,32], index: 8, kind: input, shape index: {}]
  %s9 = inlined_call_operand.vmem [shape: f32[1,32], index: 9, kind: input, shape index: {}]
  %s10 = inlined_call_operand.hbm [shape: f32[2,8,32], index: 10, kind: output, shape index: {}]
  %s11 = sld [smem:[#allocation0]]
  $region89: #{tpu_custom_call.1} parent=0
    _
  %s13 = ssub.s32 1, %s11
  %s14 = scalar_select 0, %s13, %s11
  $region1: #{tpu_custom_call.1} parent=0
    #allocation3 [shape = 'u8[8192]{0}', space=vmem, size = 0x2000, scoped, tag = 'input window, operand 0']
    #allocation4 [shape = 's32[2]{0}', space=sflag, size = 0x8, scoped, tag = 'scoped memory for tpu_custom_call.1']
    #allocation5 [shape = 's32[2]{0}', space=sflag, size = 0x8, scoped, tag = 'scoped memory for tpu_custom_call.1']
    #allocation6 [shape = 'u8[4096]{0}', space=vmem, size = 0x1000, scoped, tag = 'input window, operand 1']
    #allocation7 [shape = 's32[2]{0}', space=sflag, size = 0x8, scoped, tag = 'scoped memory for tpu_custom_call.1']
    #allocation8 [shape = 'u8[8192]{0}', space=vmem, size = 0x2000, scoped, tag = 'input window, operand 2, single buffered']
    #allocation9 [shape = 'u8[8192]{0}', space=vmem, size = 0x2000, scoped, tag = 'input window, operand 3, single buffered']
    #allocation10 [shape = 's32[1]{0}', space=sflag, size = 0x4, scoped, tag = 'scoped memory for tpu_custom_call.1']
    #allocation11 [shape = 'u8[8192]{0}', space=vmem, size = 0x2000, scoped, tag = 'output window, operand 0']
    %15 = vsyncpa [#allocation4], 0
    %s16 = scalar_lea.sflag [#allocation4], 1
    %17 = vsyncpa %s16, 0
    %18 = vsyncpa [#allocation7], 0
    %s19 = scalar_lea.sflag [#allocation7], 1
    %20 = vsyncpa %s19, 0
    %21 = vsyncpa [#allocation10], 0
    %22 = vsyncpa [#allocation5], 0
    %s23 = scalar_lea.sflag [#allocation5], 1
    %24 = vsyncpa %s23, 0
    loop: start=0, step=1, limit=4
    $region2: #{tpu_custom_call.1} parent=1 // loop_pre_header
      _
    $region3: #{tpu_custom_call.1} parent=1 // loop_header
      %s26 = sphi 0, %s30
      %p27 = scmp.ge.s32.totalorder %s26, 4
      %s33 = sphi 0, %s52
      %s34 = sphi 0, %s48
      %s35 = sphi 0, %s44
      %s36 = sphi 0, %s33
      %s37 = sphi 0, %s34
      %s38 = sphi 0, %s35
      %s39 = sphi 0, %s36
      %s40 = sphi 0, %s37
      %s41 = sphi 0, %s38
      %s57 = sphi 0, %s59
      %s60 = sphi 0, %s57
      %s61 = sphi 0, %s60
      %s77 = sphi 0, %s61
      %s83 = sphi 0, %s85
      %s86 = sphi 0, %s83
      %s87 = sphi 0, %s86
      %s103 = sphi 0, %s87
      %s109 = sphi 0, %s111
      %s112 = sphi 0, %s109
      %s113 = sphi 0, %s112
      %s129 = sphi 0, %s113
      %s135 = sphi 0, %s137
      %s138 = sphi 0, %s135
      %s139 = sphi 0, %s138
      %s155 = sphi 0, %s139
      %s161 = sphi 0, %s163
      %s164 = sphi 0, %s161
      %s165 = sphi 0, %s164
      %s181 = sphi 0, %s165
      %s187 = sphi 0, %s189
      %s190 = sphi 0, %s187
      %s191 = sphi 0, %s190
      %s207 = sphi 0, %s191
      %s213 = sphi 0, %s215
      %s216 = sphi 0, %s213
      %s217 = sphi 0, %s216
      %s233 = sphi 0, %s217
      %s237 = sphi 0, %s237
      %s239 = sphi 0, %s237
      %s240 = sphi 0, %s239
      %s254 = sphi 0, %s240
      %s258 = sphi 0, %s258
      %s260 = sphi 0, %s258
      %s261 = sphi 0, %s260
      %s275 = sphi 0, %s261
      %s279 = sphi 0, %s279
      %s281 = sphi 0, %s279
      %s282 = sphi 0, %s281
      %s296 = sphi 0, %s282
      %s304 = sphi 0, %s306
      %s307 = sphi 0, %s304
      %s308 = sphi 0, %s307
      %s324 = sphi 0, %s308
    $region4: #{tpu_custom_call.1} parent=1 // loop_header_branch
      %29 = sbr.rel (%p27) target = $region8
    $region5: #{tpu_custom_call.1} parent=1 // loop_body
      %s31 = ssub.s32 %s26, 1
      %s32 = ssub.s32 %s26, 2
      %s42 = sadd.s32 1, %s35
      %p43 = scmp.ge.s32.totalorder %s42, 1
      %s44 = scalar_select %p43, 0, %s42
      %s45 = sadd.s32 1, %s34
      %s46 = scalar_select %p43, %s45, %s34
      %p47 = scmp.ge.s32.totalorder %s46, 1
      %s48 = scalar_select %p47, 0, %s46
      %s49 = sadd.s32 1, %s33
      %s50 = scalar_select %p47, %s49, %s33
      %p51 = scmp.ge.s32.totalorder %s50, 2
      %s52 = scalar_select %p51, 0, %s50
      %s53 = ssub.s32 %s33, %s52
      %s54 = ssub.s32 %s34, %s48
      %s55 = sor.u32 %s53, %s54
      %p56 = scmp.eq.s32.totalorder %s55, 0
      %s58 = sadd.s32 %s57, 1
      %s59 = scalar_select %p56, %s57, %s58
      %p62 = pneg %p56
      %p63 = scmp.eq.s32.totalorder %s26, 1
      %p64 = por %p62, %p63
      %p65 = scmp.ne.s32.totalorder %s57, %s60
      %p66 = scmp.eq.s32.totalorder %s26, 0
      %p67 = por %p65, %p66
      %p68 = scmp.ne.s32.totalorder %s57, %s60
      %p69 = scmp.eq.s32.totalorder %s31, 1
      %p70 = por %p68, %p69
      %p71 = scmp.ne.s32.totalorder %s60, %s61
      %p72 = scmp.eq.s32.totalorder %s31, 0
      %p73 = por %p71, %p72
      %p74 = scmp.ne.s32.totalorder %s60, %s61
      %p75 = scmp.eq.s32.totalorder %s32, 1
      %p76 = por %p74, %p75
      %p78 = scmp.ne.s32.totalorder %s61, %s77
      %p79 = scmp.eq.s32.totalorder %s32, 0
      %p80 = por %p78, %p79
      %s81 = ssub.s32 %s33, %s52
      %p82 = scmp.eq.s32.totalorder %s81, 0
      %s84 = sadd.s32 %s83, 1
      %s85 = scalar_select %p82, %s83, %s84
      %p88 = pneg %p82
      %p89 = scmp.eq.s32.totalorder %s26, 1
      %p90 = por %p88, %p89
      %p91 = scmp.ne.s32.totalorder %s83, %s86
      %p92 = scmp.eq.s32.totalorder %s26, 0
      %p93 = por %p91, %p92
      %p94 = scmp.ne.s32.totalorder %s83, %s86
      %p95 = scmp.eq.s32.totalorder %s31, 1
      %p96 = por %p94, %p95
      %p97 = scmp.ne.s32.totalorder %s86, %s87
      %p98 = scmp.eq.s32.totalorder %s31, 0
      %p99 = por %p97, %p98
      %p100 = scmp.ne.s32.totalorder %s86, %s87
      %p101 = scmp.eq.s32.totalorder %s32, 1
      %p102 = por %p100, %p101
      %p104 = scmp.ne.s32.totalorder %s87, %s103
      %p105 = scmp.eq.s32.totalorder %s32, 0
      %p106 = por %p104, %p105
      %s107 = ssub.s32 %s35, %s44
      %p108 = scmp.eq.s32.totalorder %s107, 0
      %s110 = sadd.s32 %s109, 1
      %s111 = scalar_select %p108, %s109, %s110
      %p114 = pneg %p108
      %p115 = scmp.eq.s32.totalorder %s26, 1
      %p116 = por %p114, %p115
      %p117 = scmp.ne.s32.totalorder %s109, %s112
      %p118 = scmp.eq.s32.totalorder %s26, 0
      %p119 = por %p117, %p118
      %p120 = scmp.ne.s32.totalorder %s109, %s112
      %p121 = scmp.eq.s32.totalorder %s31, 1
      %p122 = por %p120, %p121
      %p123 = scmp.ne.s32.totalorder %s112, %s113
      %p124 = scmp.eq.s32.totalorder %s31, 0
      %p125 = por %p123, %p124
      %p126 = scmp.ne.s32.totalorder %s112, %s113
      %p127 = scmp.eq.s32.totalorder %s32, 1
      %p128 = por %p126, %p127
      %p130 = scmp.ne.s32.totalorder %s113, %s129
      %p131 = scmp.eq.s32.totalorder %s32, 0
      %p132 = por %p130, %p131
      %s133 = ssub.s32 %s35, %s44
      %p134 = scmp.eq.s32.totalorder %s133, 0
      %s136 = sadd.s32 %s135, 1
      %s137 = scalar_select %p134, %s135, %s136
      %p140 = pneg %p134
      %p141 = scmp.eq.s32.totalorder %s26, 1
      %p142 = por %p140, %p141
      %p143 = scmp.ne.s32.totalorder %s135, %s138
      %p144 = scmp.eq.s32.totalorder %s26, 0
      %p145 = por %p143, %p144
      %p146 = scmp.ne.s32.totalorder %s135, %s138
      %p147 = scmp.eq.s32.totalorder %s31, 1
      %p148 = por %p146, %p147
      %p149 = scmp.ne.s32.totalorder %s138, %s139
      %p150 = scmp.eq.s32.totalorder %s31, 0
      %p151 = por %p149, %p150
      %p152 = scmp.ne.s32.totalorder %s138, %s139
      %p153 = scmp.eq.s32.totalorder %s32, 1
      %p154 = por %p152, %p153
      %p156 = scmp.ne.s32.totalorder %s139, %s155
      %p157 = scmp.eq.s32.totalorder %s32, 0
      %p158 = por %p156, %p157
      %s159 = ssub.s32 %s35, %s44
      %p160 = scmp.eq.s32.totalorder %s159, 0
      %s162 = sadd.s32 %s161, 1
      %s163 = scalar_select %p160, %s161, %s162
      %p166 = pneg %p160
      %p167 = scmp.eq.s32.totalorder %s26, 1
      %p168 = por %p166, %p167
      %p169 = scmp.ne.s32.totalorder %s161, %s164
      %p170 = scmp.eq.s32.totalorder %s26, 0
      %p171 = por %p169, %p170
      %p172 = scmp.ne.s32.totalorder %s161, %s164
      %p173 = scmp.eq.s32.totalorder %s31, 1
      %p174 = por %p172, %p173
      %p175 = scmp.ne.s32.totalorder %s164, %s165
      %p176 = scmp.eq.s32.totalorder %s31, 0
      %p177 = por %p175, %p176
      %p178 = scmp.ne.s32.totalorder %s164, %s165
      %p179 = scmp.eq.s32.totalorder %s32, 1
      %p180 = por %p178, %p179
      %p182 = scmp.ne.s32.totalorder %s165, %s181
      %p183 = scmp.eq.s32.totalorder %s32, 0
      %p184 = por %p182, %p183
      %s185 = ssub.s32 %s35, %s44
      %p186 = scmp.eq.s32.totalorder %s185, 0
      %s188 = sadd.s32 %s187, 1
      %s189 = scalar_select %p186, %s187, %s188
      %p192 = pneg %p186
      %p193 = scmp.eq.s32.totalorder %s26, 1
      %p194 = por %p192, %p193
      %p195 = scmp.ne.s32.totalorder %s187, %s190
      %p196 = scmp.eq.s32.totalorder %s26, 0
      %p197 = por %p195, %p196
      %p198 = scmp.ne.s32.totalorder %s187, %s190
      %p199 = scmp.eq.s32.totalorder %s31, 1
      %p200 = por %p198, %p199
      %p201 = scmp.ne.s32.totalorder %s190, %s191
      %p202 = scmp.eq.s32.totalorder %s31, 0
      %p203 = por %p201, %p202
      %p204 = scmp.ne.s32.totalorder %s190, %s191
      %p205 = scmp.eq.s32.totalorder %s32, 1
      %p206 = por %p204, %p205
      %p208 = scmp.ne.s32.totalorder %s191, %s207
      %p209 = scmp.eq.s32.totalorder %s32, 0
      %p210 = por %p208, %p209
      %s211 = ssub.s32 %s35, %s44
      %p212 = scmp.eq.s32.totalorder %s211, 0
      %s214 = sadd.s32 %s213, 1
      %s215 = scalar_select %p212, %s213, %s214
      %p218 = pneg %p212
      %p219 = scmp.eq.s32.totalorder %s26, 1
      %p220 = por %p218, %p219
      %p221 = scmp.ne.s32.totalorder %s213, %s216
      %p222 = scmp.eq.s32.totalorder %s26, 0
      %p223 = por %p221, %p222
      %p224 = scmp.ne.s32.totalorder %s213, %s216
      %p225 = scmp.eq.s32.totalorder %s31, 1
      %p226 = por %p224, %p225
      %p227 = scmp.ne.s32.totalorder %s216, %s217
      %p228 = scmp.eq.s32.totalorder %s31, 0
      %p229 = por %p227, %p228
      %p230 = scmp.ne.s32.totalorder %s216, %s217
      %p231 = scmp.eq.s32.totalorder %s32, 1
      %p232 = por %p230, %p231
      %p234 = scmp.ne.s32.totalorder %s217, %s233
      %p235 = scmp.eq.s32.totalorder %s32, 0
      %p236 = por %p234, %p235
      %s238 = sadd.s32 %s237, 1
      %p241 = scmp.eq.s32.totalorder %s26, 1
      %p242 = scmp.ne.s32.totalorder %s237, %s239
      %p243 = scmp.eq.s32.totalorder %s26, 0
      %p244 = por %p242, %p243
      %p245 = scmp.ne.s32.totalorder %s237, %s239
      %p246 = scmp.eq.s32.totalorder %s31, 1
      %p247 = por %p245, %p246
      %p248 = scmp.ne.s32.totalorder %s239, %s240
      %p249 = scmp.eq.s32.totalorder %s31, 0
      %p250 = por %p248, %p249
      %p251 = scmp.ne.s32.totalorder %s239, %s240
      %p252 = scmp.eq.s32.totalorder %s32, 1
      %p253 = por %p251, %p252
      %p255 = scmp.ne.s32.totalorder %s240, %s254
      %p256 = scmp.eq.s32.totalorder %s32, 0
      %p257 = por %p255, %p256
      %s259 = sadd.s32 %s258, 1
      %p262 = scmp.eq.s32.totalorder %s26, 1
      %p263 = scmp.ne.s32.totalorder %s258, %s260
      %p264 = scmp.eq.s32.totalorder %s26, 0
      %p265 = por %p263, %p264
      %p266 = scmp.ne.s32.totalorder %s258, %s260
      %p267 = scmp.eq.s32.totalorder %s31, 1
      %p268 = por %p266, %p267
      %p269 = scmp.ne.s32.totalorder %s260, %s261
      %p270 = scmp.eq.s32.totalorder %s31, 0
      %p271 = por %p269, %p270
      %p272 = scmp.ne.s32.totalorder %s260, %s261
      %p273 = scmp.eq.s32.totalorder %s32, 1
      %p274 = por %p272, %p273
      %p276 = scmp.ne.s32.totalorder %s261, %s275
      %p277 = scmp.eq.s32.totalorder %s32, 0
      %p278 = por %p276, %p277
      %s280 = sadd.s32 %s279, 1
      %p283 = scmp.eq.s32.totalorder %s26, 1
      %p284 = scmp.ne.s32.totalorder %s279, %s281
      %p285 = scmp.eq.s32.totalorder %s26, 0
      %p286 = por %p284, %p285
      %p287 = scmp.ne.s32.totalorder %s279, %s281
      %p288 = scmp.eq.s32.totalorder %s31, 1
      %p289 = por %p287, %p288
      %p290 = scmp.ne.s32.totalorder %s281, %s282
      %p291 = scmp.eq.s32.totalorder %s31, 0
      %p292 = por %p290, %p291
      %p293 = scmp.ne.s32.totalorder %s281, %s282
      %p294 = scmp.eq.s32.totalorder %s32, 1
      %p295 = por %p293, %p294
      %p297 = scmp.ne.s32.totalorder %s282, %s296
      %p298 = scmp.eq.s32.totalorder %s32, 0
      %p299 = por %p297, %p298
      %s300 = ssub.s32 %s33, %s52
      %s301 = ssub.s32 %s34, %s48
      %s302 = sor.u32 %s300, %s301
      %p303 = scmp.eq.s32.totalorder %s302, 0
      %s305 = sadd.s32 %s304, 1
      %s306 = scalar_select %p303, %s304, %s305
      %p309 = pneg %p303
      %p310 = scmp.eq.s32.totalorder %s26, 1
      %p311 = por %p309, %p310
      %p312 = scmp.ne.s32.totalorder %s304, %s307
      %p313 = scmp.eq.s32.totalorder %s26, 0
      %p314 = por %p312, %p313
      %p315 = scmp.ne.s32.totalorder %s304, %s307
      %p316 = scmp.eq.s32.totalorder %s31, 1
      %p317 = por %p315, %p316
      %p318 = scmp.ne.s32.totalorder %s307, %s308
      %p319 = scmp.eq.s32.totalorder %s31, 0
      %p320 = por %p318, %p319
      %p321 = scmp.ne.s32.totalorder %s307, %s308
      %p322 = scmp.eq.s32.totalorder %s32, 1
      %p323 = por %p321, %p322
      %p325 = scmp.ne.s32.totalorder %s308, %s324
      %p326 = scmp.eq.s32.totalorder %s32, 0
      %p327 = por %p325, %p326
      %p328 = scmp.le.s32.totalorder 1, %s26
      %p329 = scmp.lt.s32.totalorder %s26, 3
      %p330 = pnand %p328, %p329
      %p331 = pneg %p330
      // Predicated region
      $region9: #{tpu_custom_call.1} parent=5 // pred_check
        _
      $region10: #{tpu_custom_call.1} parent=5 // pred_check_branch
        %333 = sbr.rel (%p330) target = $region12
      $region11: #{tpu_custom_call.1} parent=5 // pred_region
        %s334 = ssub.s32 %s26, 1
        // Predicated region
        $region13: #{tpu_custom_call.1} parent=11 // pred_check
          %p335 = pneg %p125
        $region14: #{tpu_custom_call.1} parent=11 // pred_check_branch
          %337 = sbr.rel (%p335) target = $region16
        $region15: #{tpu_custom_call.1} parent=11 // pred_region
          %s339 = ssub.s32 256, 256
          %340 = vsyncadd [#allocation7], %s339
          %s341 = smul.addr %s38, 4
          %s342 = smul.addr %s341, 64
          %s343 = scalar_lea.hbm %s2, %s342
          %s344 = sshll.u32 [#allocation8], 4
          %s345 = int_to_ptr.vmem [resolvable:$true] %s344
          %350 = dma.hbm_to_vmem [thread:$0]  %s343, 256, %s345, [#allocation7], 64, 64, 4
        $region16: #{tpu_custom_call.1} parent=11 // pred_fallthru
          _
        // Predicated region
        $region17: #{tpu_custom_call.1} parent=11 // pred_check
          %p351 = pneg %p151
        $region18: #{tpu_custom_call.1} parent=11 // pred_check_branch
          %353 = sbr.rel (%p351) target = $region20
        $region19: #{tpu_custom_call.1} parent=11 // pred_region
          %s355 = ssub.s32 256, 256
          %356 = vsyncadd [#allocation10], %s355
          %s357 = smul.addr %s38, 4
          %s358 = smul.addr %s357, 64
          %s359 = scalar_lea.hbm %s3, %s358
          %s360 = sshll.u32 [#allocation9], 4
          %s361 = int_to_ptr.vmem [resolvable:$true] %s360
          %366 = dma.hbm_to_vmem [thread:$0]  %s359, 256, %s361, [#allocation10], 64, 64, 4
        $region20: #{tpu_custom_call.1} parent=11 // pred_fallthru
          _
        // Predicated region
        $region21: #{tpu_custom_call.1} parent=11 // pred_check
          %p367 = pneg %p177
        $region22: #{tpu_custom_call.1} parent=11 // pred_check_branch
          %369 = sbr.rel (%p367) target = $region24
        $region23: #{tpu_custom_call.1} parent=11 // pred_region
          %p370 = scmp.lt.s32.totalorder %s38, 0
          %s371 = scalar_select %p370, %s38, 0
          %s372 = scalar_lea.vmem %s4, %s371
        $region24: #{tpu_custom_call.1} parent=11 // pred_fallthru
          _
        // Predicated region
        $region25: #{tpu_custom_call.1} parent=11 // pred_check
          %p373 = pneg %p203
        $region26: #{tpu_custom_call.1} parent=11 // pred_check_branch
          %375 = sbr.rel (%p373) target = $region28
        $region27: #{tpu_custom_call.1} parent=11 // pred_region
          %p376 = scmp.lt.s32.totalorder %s38, 0
          %s377 = scalar_select %p376, %s38, 0
          %s378 = scalar_lea.vmem %s5, %s377
        $region28: #{tpu_custom_call.1} parent=11 // pred_fallthru
          _
        // Predicated region
        $region29: #{tpu_custom_call.1} parent=11 // pred_check
          %p379 = pneg %p229
        $region30: #{tpu_custom_call.1} parent=11 // pred_check_branch
          %381 = sbr.rel (%p379) target = $region32
        $region31: #{tpu_custom_call.1} parent=11 // pred_region
          %p382 = scmp.lt.s32.totalorder %s38, 0
          %s383 = scalar_select %p382, %s38, 0
          %s384 = smul.addr %s383, 4
          %s385 = smul.addr %s384, 4
          %s386 = scalar_lea.vmem %s6, %s385
        $region32: #{tpu_custom_call.1} parent=11 // pred_fallthru
          _
        // Predicated region
        $region33: #{tpu_custom_call.1} parent=11 // pred_check
          %p387 = pneg %p250
        $region34: #{tpu_custom_call.1} parent=11 // pred_check_branch
          %389 = sbr.rel (%p387) target = $region36
        $region35: #{tpu_custom_call.1} parent=11 // pred_region
          _
        $region36: #{tpu_custom_call.1} parent=11 // pred_fallthru
          _
        // Predicated region
        $region37: #{tpu_custom_call.1} parent=11 // pred_check
          %p390 = pneg %p271
        $region38: #{tpu_custom_call.1} parent=11 // pred_check_branch
          %392 = sbr.rel (%p390) target = $region40
        $region39: #{tpu_custom_call.1} parent=11 // pred_region
          _
        $region40: #{tpu_custom_call.1} parent=11 // pred_fallthru
          _
        // Predicated region
        $region41: #{tpu_custom_call.1} parent=11 // pred_check
          %p393 = pneg %p292
        $region42: #{tpu_custom_call.1} parent=11 // pred_check_branch
          %395 = sbr.rel (%p393) target = $region44
        $region43: #{tpu_custom_call.1} parent=11 // pred_region
          _
        $region44: #{tpu_custom_call.1} parent=11 // pred_fallthru
          _
      $region12: #{tpu_custom_call.1} parent=5 // pred_fallthru
        _
      %p396 = scmp.lt.s32.totalorder %s26, 2
      // Predicated region
      $region45: #{tpu_custom_call.1} parent=5 // pred_check
        %p397 = pneg %p396
      $region46: #{tpu_custom_call.1} parent=5 // pred_check_branch
        %399 = sbr.rel (%p397) target = $region48
      $region47: #{tpu_custom_call.1} parent=5 // pred_region
        // Predicated region
        $region49: #{tpu_custom_call.1} parent=47 // pred_check
          %p400 = pneg %p67
        $region50: #{tpu_custom_call.1} parent=47 // pred_check_branch
          %402 = sbr.rel (%p400) target = $region52
        $region51: #{tpu_custom_call.1} parent=47 // pred_region
          %s403 = sand.u32 %s57, 1
          %s404 = scalar_lea.sflag [#allocation4], %s403
          %s405 = sand.u32 %s57, 1
          %s406 = smul.addr %s405, 8
          %s407 = scalar_lea.vmem [#allocation3], %s406
          %s409 = ssub.s32 128, 128
          %410 = vsyncadd %s404, %s409
          %s411 = sadd.s32 %s34, %s33
          %s412 = smul.addr %s411, 128
          %s413 = scalar_lea.hbm %s0, %s412
          %s415 = sshll.u32 %s407, 4
          %s416 = int_to_ptr.vmem [resolvable:$true] %s415
          %418 = dma.hbm_to_vmem [thread:$0]  %s413, 128, %s416, %s404
        $region52: #{tpu_custom_call.1} parent=47 // pred_fallthru
          _
        // Predicated region
        $region53: #{tpu_custom_call.1} parent=47 // pred_check
          %p419 = pneg %p93
        $region54: #{tpu_custom_call.1} parent=47 // pred_check_branch
          %421 = sbr.rel (%p419) target = $region56
        $region55: #{tpu_custom_call.1} parent=47 // pred_region
          %s422 = sand.u32 %s26, 1
          %s423 = scalar_lea.sflag [#allocation7], %s422
          %s424 = sand.u32 %s83, 1
          %s425 = smul.addr %s424, 4
          %s426 = scalar_lea.vmem [#allocation6], %s425
          %s428 = ssub.s32 64, 64
          %429 = vsyncadd %s423, %s428
          %s430 = smul.addr %s33, 64
          %s431 = scalar_lea.hbm %s1, %s430
          %s433 = sshll.u32 %s426, 4
          %s434 = int_to_ptr.vmem [resolvable:$true] %s433
          %436 = dma.hbm_to_vmem [thread:$0]  %s431, 64, %s434, %s423
        $region56: #{tpu_custom_call.1} parent=47 // pred_fallthru
          _
      $region48: #{tpu_custom_call.1} parent=5 // pred_fallthru
        _
      %p437 = scmp.le.s32.totalorder 1, %s26
      %p438 = scmp.lt.s32.totalorder %s26, 3
      %p439 = pnand %p437, %p438
      %p440 = pneg %p439
      // Predicated region
      $region57: #{tpu_custom_call.1} parent=5 // pred_check
        _
      $region58: #{tpu_custom_call.1} parent=5 // pred_check_branch
        %442 = sbr.rel (%p439) target = $region60
      $region59: #{tpu_custom_call.1} parent=5 // pred_region
        %s443 = ssub.s32 %s26, 1
        %s444 = sand.u32 %s60, 1
        %s445 = scalar_lea.sflag [#allocation4], %s444
        %s446 = sand.u32 %s60, 1
        %s447 = smul.addr %s446, 8
        %s448 = scalar_lea.vmem [#allocation3], %s447
        // Predicated region
        $region61: #{tpu_custom_call.1} parent=59 // pred_check
          %p449 = pneg %p73
        $region62: #{tpu_custom_call.1} parent=59 // pred_check_branch
          %451 = sbr.rel (%p449) target = $region64
        $region63: #{tpu_custom_call.1} parent=59 // pred_region
          %452 = dma.done %s445, 128
        $region64: #{tpu_custom_call.1} parent=59 // pred_fallthru
          _
        %s453 = sand.u32 %s31, 1
        %s454 = scalar_lea.sflag [#allocation7], %s453
        %s455 = sand.u32 %s86, 1
        %s456 = smul.addr %s455, 4
        %s457 = scalar_lea.vmem [#allocation6], %s456
        // Predicated region
        $region65: #{tpu_custom_call.1} parent=59 // pred_check
          %p458 = pneg %p99
        $region66: #{tpu_custom_call.1} parent=59 // pred_check_branch
          %460 = sbr.rel (%p458) target = $region68
        $region67: #{tpu_custom_call.1} parent=59 // pred_region
          %461 = dma.done %s454, 64
        $region68: #{tpu_custom_call.1} parent=59 // pred_fallthru
          _
        // Predicated region
        $region69: #{tpu_custom_call.1} parent=59 // pred_check
          %p462 = pneg %p125
        $region70: #{tpu_custom_call.1} parent=59 // pred_check_branch
          %464 = sbr.rel (%p462) target = $region72
        $region71: #{tpu_custom_call.1} parent=59 // pred_region
          %465 = dma.done [#allocation7], 256
        $region72: #{tpu_custom_call.1} parent=59 // pred_fallthru
          _
        // Predicated region
        $region73: #{tpu_custom_call.1} parent=59 // pred_check
          %p466 = pneg %p151
        $region74: #{tpu_custom_call.1} parent=59 // pred_check_branch
          %468 = sbr.rel (%p466) target = $region76
        $region75: #{tpu_custom_call.1} parent=59 // pred_region
          %469 = dma.done [#allocation10], 256
        $region76: #{tpu_custom_call.1} parent=59 // pred_fallthru
          _
        %s470 = sand.u32 %s60, 1
        %s471 = scalar_lea.sflag [#allocation4], %s470
        %s472 = sand.u32 %s60, 1
        %s473 = smul.addr %s472, 8
        %s474 = scalar_lea.vmem [#allocation3], %s473
        %p475 = pneg %p73
        %p476 = pneg %p70
        %s477 = sand.u32 %s31, 1
        %s478 = scalar_lea.sflag [#allocation7], %s477
        %s479 = sand.u32 %s86, 1
        %s480 = smul.addr %s479, 4
        %s481 = scalar_lea.vmem [#allocation6], %s480
        %p482 = pneg %p99
        %p483 = pneg %p96
        %p484 = pneg %p125
        %p485 = pneg %p122
        %p486 = pneg %p151
        %p487 = pneg %p148
        %p488 = scmp.lt.s32.totalorder %s38, 0
        %s489 = scalar_select %p488, %s38, 0
        %s490 = scalar_lea.vmem %s4, %s489
        %p491 = pneg %p177
        %p492 = pneg %p174
        %p493 = scmp.lt.s32.totalorder %s38, 0
        %s494 = scalar_select %p493, %s38, 0
        %s495 = scalar_lea.vmem %s5, %s494
        %p496 = pneg %p203
        %p497 = pneg %p200
        %p498 = scmp.lt.s32.totalorder %s38, 0
        %s499 = scalar_select %p498, %s38, 0
        %s500 = smul.addr %s499, 4
        %s501 = smul.addr %s500, 4
        %s502 = scalar_lea.vmem %s6, %s501
        %p503 = pneg %p229
        %p504 = pneg %p226
        %p505 = pneg %p250
        %p506 = pneg %p247
        %p507 = pneg %p271
        %p508 = pneg %p268
        %p509 = pneg %p292
        %p510 = pneg %p289
        %p511 = pneg %p320
        %p512 = pneg %p317
        %s513 = sand.u32 %s307, 1
        %s514 = scalar_lea.sflag [#allocation5], %s513
        %s515 = sand.u32 %s307, 1
        %s516 = smul.addr %s515, 8
        %s517 = scalar_lea.vmem [#allocation11], %s516
        %p518 = scmp.lt.s32.totalorder %s38, 0
        %s519 = scalar_select %p518, %s38, 0
        %s520 = scalar_lea.vmem %s4, %s519
        %p521 = scmp.lt.s32.totalorder %s38, 0
        %s522 = scalar_select %p521, %s38, 0
        %s523 = scalar_lea.vmem %s5, %s522
        %p524 = scmp.lt.s32.totalorder %s38, 0
        %s525 = scalar_select %p524, %s38, 0
        %s526 = smul.addr %s525, 4
        %s527 = smul.addr %s526, 4
        %s528 = scalar_lea.vmem %s6, %s527
        %v530 = vld [vmem:[%s457] sm:$0xf]
        %v531 = vld [vmem:[#allocation8] sm:$0xf]
        %v532 = vld [vmem:[#allocation8 + $0x4] sm:$0xf]
        %v533 = vld [vmem:[#allocation8 + $0x8] sm:$0xf]
        %v534 = vld [vmem:[#allocation8 + $0xc] sm:$0xf]
        %v535 = vld [vmem:[%s520] sm:$0x1]
        %v537 = vlaneseq
        %v538 = vshrl.u32 %v537, 7
        %v539 = vsub.s32 0, %v538
        %v540 = vrot.slane %v535, %v539
        %v546 = vunpack.c.l.b16 %v531
        %v547 = vunpack.c.l.b16 %v532
        %v548 = vunpack.c.l.b16 %v533
        %v549 = vunpack.c.l.b16 %v534
        %v550 = vpack.c.b16 %v547, %v546
        %v551 = vpack.c.b16 %v549, %v548
        %vm554 = vcmask 261120
        %v556 = vsel %vm554, %v530, 0
        %558 = vmatprep.subr.bf16.mxu0 0
        %559 = vmatpush1.bf16.msra.mxu0 %v550
        %560 = vmatprep.subr.bf16.mxu0 0
        %561 = vmatpush1.bf16.msra.mxu0 %v551
        %562 = vmatprep.subr.bf16.mxu0 0
        %563 = vmatpush1.bf16.msra.mxu0 0
        %564 = vmatprep.subr.bf16.mxu0 0
        %565 = vmatpush1.bf16.msra.mxu0 0
        %566 = vmatprep.subr.bf16.mxu0 0
        %567 = vmatpush1.bf16.msra.mxu0 0
        %568 = vmatprep.subr.bf16.mxu0 0
        %569 = vmatpush1.bf16.msra.mxu0 0
        %570 = vmatprep.subr.bf16.mxu0 0
        %571 = vmatpush1.bf16.msra.mxu0 0
        %572 = vmatprep.subr.bf16.mxu0 0
        %573 = vmatpush1.bf16.msra.mxu0 0
        %574 = vmatprep.subr.bf16.mxu0 0
        %575 = vmatpush1.bf16.msra.mxu0 0
        %576 = vmatprep.subr.bf16.mxu0 0
        %577 = vmatpush1.bf16.msra.mxu0 0
        %578 = vmatprep.subr.bf16.mxu0 0
        %579 = vmatpush1.bf16.msra.mxu0 0
        %580 = vmatprep.subr.bf16.mxu0 0
        %581 = vmatpush1.bf16.msra.mxu0 0
        %582 = vmatprep.subr.bf16.mxu0 0
        %583 = vmatpush1.bf16.msra.mxu0 0
        %584 = vmatprep.subr.bf16.mxu0 0
        %585 = vmatpush1.bf16.msra.mxu0 0
        %586 = vmatprep.subr.bf16.mxu0 0
        %587 = vmatpush1.bf16.msra.mxu0 0
        %588 = vmatprep.subr.bf16.mxu0 0
        %589 = vmatpush1.bf16.msra.mxu0 0
        %590 = vmatprep.mubr.bf16.mxu0 0
        %591 = vmatmul.mubr.bf16.gmra.mrb[0].mxu0 %v556
        %v592 = vpop.f32.mrb[0].mxu0
        %v593 = vadd.f32 %v540, %v592
        %v594 = vpop.f32.mrb[0].mxu0
        %v595 = vpop.f32.mrb[0].mxu0
        %v596 = vpop.f32.mrb[0].mxu0
        %597 = vdwg.mxu0
        %v598 = vld [vmem:[#allocation9] sm:$0xf]
        %v599 = vld [vmem:[#allocation9 + $0x4] sm:$0xf]
        %v600 = vld [vmem:[#allocation9 + $0x8] sm:$0xf]
        %v601 = vld [vmem:[#allocation9 + $0xc] sm:$0xf]
        %v602 = vld [vmem:[%s523] sm:$0x1]
        %v604 = vlaneseq
        %v605 = vshrl.u32 %v604, 7
        %v606 = vsub.s32 0, %v605
        %v607 = vrot.slane %v602, %v606
        %v613 = vunpack.c.l.b16 %v598
        %v614 = vunpack.c.l.b16 %v599
        %v615 = vunpack.c.l.b16 %v600
        %v616 = vunpack.c.l.b16 %v601
        %v617 = vpack.c.b16 %v614, %v613
        %v618 = vpack.c.b16 %v616, %v615
        %621 = vmatprep.subr.bf16.mxu0 0
        %622 = vmatpush1.bf16.msra.mxu0 %v617
        %623 = vmatprep.subr.bf16.mxu0 0
        %624 = vmatpush1.bf16.msra.mxu0 %v618
        %625 = vmatprep.subr.bf16.mxu0 0
        %626 = vmatpush1.bf16.msra.mxu0 0
        %627 = vmatprep.subr.bf16.mxu0 0
        %628 = vmatpush1.bf16.msra.mxu0 0
        %629 = vmatprep.subr.bf16.mxu0 0
        %630 = vmatpush1.bf16.msra.mxu0 0
        %631 = vmatprep.subr.bf16.mxu0 0
        %632 = vmatpush1.bf16.msra.mxu0 0
        %633 = vmatprep.subr.bf16.mxu0 0
        %634 = vmatpush1.bf16.msra.mxu0 0
        %635 = vmatprep.subr.bf16.mxu0 0
        %636 = vmatpush1.bf16.msra.mxu0 0
        %637 = vmatprep.subr.bf16.mxu0 0
        %638 = vmatpush1.bf16.msra.mxu0 0
        %639 = vmatprep.subr.bf16.mxu0 0
        %640 = vmatpush1.bf16.msra.mxu0 0
        %641 = vmatprep.subr.bf16.mxu0 0
        %642 = vmatpush1.bf16.msra.mxu0 0
        %643 = vmatprep.subr.bf16.mxu0 0
        %644 = vmatpush1.bf16.msra.mxu0 0
        %645 = vmatprep.subr.bf16.mxu0 0
        %646 = vmatpush1.bf16.msra.mxu0 0
        %647 = vmatprep.subr.bf16.mxu0 0
        %648 = vmatpush1.bf16.msra.mxu0 0
        %649 = vmatprep.subr.bf16.mxu0 0
        %650 = vmatpush1.bf16.msra.mxu0 0
        %651 = vmatprep.subr.bf16.mxu0 0
        %652 = vmatpush1.bf16.msra.mxu0 0
        %653 = vmatprep.mubr.bf16.mxu0 0
        %654 = vmatmul.mubr.bf16.gmra.mrb[0].mxu0 %v556
        %v655 = vpop.f32.mrb[0].mxu0
        %v656 = vadd.f32 %v607, %v655
        %v657 = vpop.f32.mrb[0].mxu0
        %v658 = vpop.f32.mrb[0].mxu0
        %v659 = vpop.f32.mrb[0].mxu0
        %660 = vdwg.mxu0
        %v661 = vpack.c.bf16 %v593, %v593
        %v662 = vpack.c.bf16 %v656, %v656
        %vm663 = vcmask 64512
        %v665 = vsel %vm663, %v661, 0
        %v668 = vsel %vm663, %v662, 0
        %670 = vmatprep.subr.bf16.mxu0 0
        %671 = vmatpush1.bf16.xpose.msra.mxu0 %v668
        %672 = vmatprep.subr.bf16.mxu0 0
        %673 = vmatpush1.bf16.xpose.msra.mxu0 0
        %674 = vmatprep.subr.bf16.mxu0 0
        %675 = vmatpush1.bf16.xpose.msra.mxu0 0
        %676 = vmatprep.subr.bf16.mxu0 0
        %677 = vmatpush1.bf16.xpose.msra.mxu0 0
        %678 = vmatprep.subr.bf16.mxu0 0
        %679 = vmatpush1.bf16.xpose.msra.mxu0 0
        %680 = vmatprep.subr.bf16.mxu0 0
        %681 = vmatpush1.bf16.xpose.msra.mxu0 0
        %682 = vmatprep.subr.bf16.mxu0 0
        %683 = vmatpush1.bf16.xpose.msra.mxu0 0
        %684 = vmatprep.subr.bf16.mxu0 0
        %685 = vmatpush1.bf16.xpose.msra.mxu0 0
        %686 = vmatprep.subr.bf16.mxu0 0
        %687 = vmatpush1.bf16.xpose.msra.mxu0 0
        %688 = vmatprep.subr.bf16.mxu0 0
        %689 = vmatpush1.bf16.xpose.msra.mxu0 0
        %690 = vmatprep.subr.bf16.mxu0 0
        %691 = vmatpush1.bf16.xpose.msra.mxu0 0
        %692 = vmatprep.subr.bf16.mxu0 0
        %693 = vmatpush1.bf16.xpose.msra.mxu0 0
        %694 = vmatprep.subr.bf16.mxu0 0
        %695 = vmatpush1.bf16.xpose.msra.mxu0 0
        %696 = vmatprep.subr.bf16.mxu0 0
        %697 = vmatpush1.bf16.xpose.msra.mxu0 0
        %698 = vmatprep.subr.bf16.mxu0 0
        %699 = vmatpush1.bf16.xpose.msra.mxu0 0
        %700 = vmatprep.subr.bf16.mxu0 0
        %701 = vmatpush1.bf16.xpose.msra.mxu0 0
        %702 = vmatprep.mubr.bf16.mxu0 0
        %703 = vmatmul.mubr.bf16.gmra.mrb[0].mxu0 %v665
        %v704 = vpop.f32.mrb[0].mxu0
        %v705 = vadd.f32 0.0, %v704
        %v706 = vpop.f32.mrb[0].mxu0
        %v707 = vpop.f32.mrb[0].mxu0
        %v708 = vpop.f32.mrb[0].mxu0
        %709 = vdwg.mxu0
        %v710 = vsel %vm663, %v705, -inf
        %711 = vmax.xlane.f32.xlu0 %v710
        %v712 = vpop.xlane.xlu0 %711
        %v713 = vsub.f32 %v705, %v712
        %v714 = vpack.c.bf16 %v713, %v713
        %v716 = vmul.bf16 %v714, 1069105081
        %v717 = vpow.bf16.pop %v716
        %v718 = vunpack.c.l.bf16 %v717
        %v719 = vsel %vm663, %v718, 0.0
        %720 = vadd.xlane.f32.xlu0 %v719
        %v721 = vpop.xlane.xlu0 %720
        %723 = vrot.lane.b32.xlu0 %v662, 96
        %v724 = vpop.permute.xlu0 %723
        %v726 = vsel %vm663, %v717, 0
        %vm728 = vcmask 1043456
        %v730 = vsel %vm728, %v724, 0
        %732 = vmatprep.subr.bf16.mxu0 0
        %733 = vmatpush1.bf16.msra.mxu0 %v730
        %734 = vmatprep.subr.bf16.mxu0 0
        %735 = vmatpush1.bf16.msra.mxu0 0
        %736 = vmatprep.subr.bf16.mxu0 0
        %737 = vmatpush1.bf16.msra.mxu0 0
        %738 = vmatprep.subr.bf16.mxu0 0
        %739 = vmatpush1.bf16.msra.mxu0 0
        %740 = vmatprep.subr.bf16.mxu0 0
        %741 = vmatpush1.bf16.msra.mxu0 0
        %742 = vmatprep.subr.bf16.mxu0 0
        %743 = vmatpush1.bf16.msra.mxu0 0
        %744 = vmatprep.subr.bf16.mxu0 0
        %745 = vmatpush1.bf16.msra.mxu0 0
        %746 = vmatprep.subr.bf16.mxu0 0
        %747 = vmatpush1.bf16.msra.mxu0 0
        %748 = vmatprep.subr.bf16.mxu0 0
        %749 = vmatpush1.bf16.msra.mxu0 0
        %750 = vmatprep.subr.bf16.mxu0 0
        %751 = vmatpush1.bf16.msra.mxu0 0
        %752 = vmatprep.subr.bf16.mxu0 0
        %753 = vmatpush1.bf16.msra.mxu0 0
        %754 = vmatprep.subr.bf16.mxu0 0
        %755 = vmatpush1.bf16.msra.mxu0 0
        %756 = vmatprep.subr.bf16.mxu0 0
        %757 = vmatpush1.bf16.msra.mxu0 0
        %758 = vmatprep.subr.bf16.mxu0 0
        %759 = vmatpush1.bf16.msra.mxu0 0
        %760 = vmatprep.subr.bf16.mxu0 0
        %761 = vmatpush1.bf16.msra.mxu0 0
        %762 = vmatprep.subr.bf16.mxu0 0
        %763 = vmatpush1.bf16.msra.mxu0 0
        %764 = vmatprep.mubr.bf16.mxu0 0
        %765 = vmatmul.mubr.bf16.gmra.mrb[0].mxu0 %v726
        %v766 = vpop.f32.mrb[0].mxu0
        %v767 = vadd.f32 0.0, %v766
        %v768 = vpop.f32.mrb[0].mxu0
        %v769 = vpop.f32.mrb[0].mxu0
        %v770 = vpop.f32.mrb[0].mxu0
        %771 = vdwg.mxu0
        %v772 = vrcp.pop %v721
        %v773 = vmul.f32 %v767, %v772
        %v774 = vpack.c.bf16 %v773, %v773
        %776 = vrot.lane.b32.xlu0 %v661, 120
        %v777 = vpop.permute.xlu0 %776
        %778 = vrot.lane.b32.xlu0 %v662, 120
        %v779 = vpop.permute.xlu0 %778
        %v781 = vsel %vm663, %v777, 0
        %v784 = vsel %vm663, %v779, 0
        %786 = vmatprep.subr.bf16.mxu0 0
        %787 = vmatpush1.bf16.xpose.msra.mxu0 %v784
        %788 = vmatprep.subr.bf16.mxu0 0
        %789 = vmatpush1.bf16.xpose.msra.mxu0 0
        %790 = vmatprep.subr.bf16.mxu0 0
        %791 = vmatpush1.bf16.xpose.msra.mxu0 0
        %792 = vmatprep.subr.bf16.mxu0 0
        %793 = vmatpush1.bf16.xpose.msra.mxu0 0
        %794 = vmatprep.subr.bf16.mxu0 0
        %795 = vmatpush1.bf16.xpose.msra.mxu0 0
        %796 = vmatprep.subr.bf16.mxu0 0
        %797 = vmatpush1.bf16.xpose.msra.mxu0 0
        %798 = vmatprep.subr.bf16.mxu0 0
        %799 = vmatpush1.bf16.xpose.msra.mxu0 0
        %800 = vmatprep.subr.bf16.mxu0 0
        %801 = vmatpush1.bf16.xpose.msra.mxu0 0
        %802 = vmatprep.subr.bf16.mxu0 0
        %803 = vmatpush1.bf16.xpose.msra.mxu0 0
        %804 = vmatprep.subr.bf16.mxu0 0
        %805 = vmatpush1.bf16.xpose.msra.mxu0 0
        %806 = vmatprep.subr.bf16.mxu0 0
        %807 = vmatpush1.bf16.xpose.msra.mxu0 0
        %808 = vmatprep.subr.bf16.mxu0 0
        %809 = vmatpush1.bf16.xpose.msra.mxu0 0
        %810 = vmatprep.subr.bf16.mxu0 0
        %811 = vmatpush1.bf16.xpose.msra.mxu0 0
        %812 = vmatprep.subr.bf16.mxu0 0
        %813 = vmatpush1.bf16.xpose.msra.mxu0 0
        %814 = vmatprep.subr.bf16.mxu0 0
        %815 = vmatpush1.bf16.xpose.msra.mxu0 0
        %816 = vmatprep.subr.bf16.mxu0 0
        %817 = vmatpush1.bf16.xpose.msra.mxu0 0
        %818 = vmatprep.mubr.bf16.mxu0 0
        %819 = vmatmul.mubr.bf16.gmra.mrb[0].mxu0 %v781
        %v820 = vpop.f32.mrb[0].mxu0
        %v821 = vadd.f32 0.0, %v820
        %v822 = vpop.f32.mrb[0].mxu0
        %v823 = vpop.f32.mrb[0].mxu0
        %v824 = vpop.f32.mrb[0].mxu0
        %825 = vdwg.mxu0
        %v826 = vsel %vm663, %v821, -inf
        %827 = vmax.xlane.f32.xlu0 %v826
        %v828 = vpop.xlane.xlu0 %827
        %v829 = vsub.f32 %v821, %v828
        %v830 = vpack.c.bf16 %v829, %v829
        %v832 = vmul.bf16 %v830, 1069105081
        %v833 = vpow.bf16.pop %v832
        %v834 = vunpack.c.l.bf16 %v833
        %v835 = vsel %vm663, %v834, 0.0
        %836 = vadd.xlane.f32.xlu0 %v835
        %v837 = vpop.xlane.xlu0 %836
        %838 = vrot.lane.b32.xlu0 %v662, 88
        %v839 = vpop.permute.xlu0 %838
        %v841 = vsel %vm663, %v833, 0
        %v844 = vsel %vm728, %v839, 0
        %846 = vmatprep.subr.bf16.mxu0 0
        %847 = vmatpush1.bf16.msra.mxu0 %v844
        %848 = vmatprep.subr.bf16.mxu0 0
        %849 = vmatpush1.bf16.msra.mxu0 0
        %850 = vmatprep.subr.bf16.mxu0 0
        %851 = vmatpush1.bf16.msra.mxu0 0
        %852 = vmatprep.subr.bf16.mxu0 0
        %853 = vmatpush1.bf16.msra.mxu0 0
        %854 = vmatprep.subr.bf16.mxu0 0
        %855 = vmatpush1.bf16.msra.mxu0 0
        %856 = vmatprep.subr.bf16.mxu0 0
        %857 = vmatpush1.bf16.msra.mxu0 0
        %858 = vmatprep.subr.bf16.mxu0 0
        %859 = vmatpush1.bf16.msra.mxu0 0
        %860 = vmatprep.subr.bf16.mxu0 0
        %861 = vmatpush1.bf16.msra.mxu0 0
        %862 = vmatprep.subr.bf16.mxu0 0
        %863 = vmatpush1.bf16.msra.mxu0 0
        %864 = vmatprep.subr.bf16.mxu0 0
        %865 = vmatpush1.bf16.msra.mxu0 0
        %866 = vmatprep.subr.bf16.mxu0 0
        %867 = vmatpush1.bf16.msra.mxu0 0
        %868 = vmatprep.subr.bf16.mxu0 0
        %869 = vmatpush1.bf16.msra.mxu0 0
        %870 = vmatprep.subr.bf16.mxu0 0
        %871 = vmatpush1.bf16.msra.mxu0 0
        %872 = vmatprep.subr.bf16.mxu0 0
        %873 = vmatpush1.bf16.msra.mxu0 0
        %874 = vmatprep.subr.bf16.mxu0 0
        %875 = vmatpush1.bf16.msra.mxu0 0
        %876 = vmatprep.subr.bf16.mxu0 0
        %877 = vmatpush1.bf16.msra.mxu0 0
        %878 = vmatprep.mubr.bf16.mxu0 0
        %879 = vmatmul.mubr.bf16.gmra.mrb[0].mxu0 %v841
        %v880 = vpop.f32.mrb[0].mxu0
        %v881 = vadd.f32 0.0, %v880
        %v882 = vpop.f32.mrb[0].mxu0
        %v883 = vpop.f32.mrb[0].mxu0
        %v884 = vpop.f32.mrb[0].mxu0
        %885 = vdwg.mxu0
        %v886 = vrcp.pop %v837
        %v887 = vmul.f32 %v881, %v886
        %v888 = vpack.c.bf16 %v887, %v887
        %889 = vrot.lane.b32.xlu0 %v661, 112
        %v890 = vpop.permute.xlu0 %889
        %891 = vrot.lane.b32.xlu0 %v662, 112
        %v892 = vpop.permute.xlu0 %891
        %v894 = vsel %vm663, %v890, 0
        %v897 = vsel %vm663, %v892, 0
        %899 = vmatprep.subr.bf16.mxu0 0
        %900 = vmatpush1.bf16.xpose.msra.mxu0 %v897
        %901 = vmatprep.subr.bf16.mxu0 0
        %902 = vmatpush1.bf16.xpose.msra.mxu0 0
        %903 = vmatprep.subr.bf16.mxu0 0
        %904 = vmatpush1.bf16.xpose.msra.mxu0 0
        %905 = vmatprep.subr.bf16.mxu0 0
        %906 = vmatpush1.bf16.xpose.msra.mxu0 0
        %907 = vmatprep.subr.bf16.mxu0 0
        %908 = vmatpush1.bf16.xpose.msra.mxu0 0
        %909 = vmatprep.subr.bf16.mxu0 0
        %910 = vmatpush1.bf16.xpose.msra.mxu0 0
        %911 = vmatprep.subr.bf16.mxu0 0
        %912 = vmatpush1.bf16.xpose.msra.mxu0 0
        %913 = vmatprep.subr.bf16.mxu0 0
        %914 = vmatpush1.bf16.xpose.msra.mxu0 0
        %915 = vmatprep.subr.bf16.mxu0 0
        %916 = vmatpush1.bf16.xpose.msra.mxu0 0
        %917 = vmatprep.subr.bf16.mxu0 0
        %918 = vmatpush1.bf16.xpose.msra.mxu0 0
        %919 = vmatprep.subr.bf16.mxu0 0
        %920 = vmatpush1.bf16.xpose.msra.mxu0 0
        %921 = vmatprep.subr.bf16.mxu0 0
        %922 = vmatpush1.bf16.xpose.msra.mxu0 0
        %923 = vmatprep.subr.bf16.mxu0 0
        %924 = vmatpush1.bf16.xpose.msra.mxu0 0
        %925 = vmatprep.subr.bf16.mxu0 0
        %926 = vmatpush1.bf16.xpose.msra.mxu0 0
        %927 = vmatprep.subr.bf16.mxu0 0
        %928 = vmatpush1.bf16.xpose.msra.mxu0 0
        %929 = vmatprep.subr.bf16.mxu0 0
        %930 = vmatpush1.bf16.xpose.msra.mxu0 0
        %931 = vmatprep.mubr.bf16.mxu0 0
        %932 = vmatmul.mubr.bf16.gmra.mrb[0].mxu0 %v894
        %v933 = vpop.f32.mrb[0].mxu0
        %v934 = vadd.f32 0.0, %v933
        %v935 = vpop.f32.mrb[0].mxu0
        %v936 = vpop.f32.mrb[0].mxu0
        %v937 = vpop.f32.mrb[0].mxu0
        %938 = vdwg.mxu0
        %v939 = vsel %vm663, %v934, -inf
        %940 = vmax.xlane.f32.xlu0 %v939
        %v941 = vpop.xlane.xlu0 %940
        %v942 = vsub.f32 %v934, %v941
        %v943 = vpack.c.bf16 %v942, %v942
        %v945 = vmul.bf16 %v943, 1069105081
        %v946 = vpow.bf16.pop %v945
        %v947 = vunpack.c.l.bf16 %v946
        %v948 = vsel %vm663, %v947, 0.0
        %949 = vadd.xlane.f32.xlu0 %v948
        %v950 = vpop.xlane.xlu0 %949
        %951 = vrot.lane.b32.xlu0 %v662, 80
        %v952 = vpop.permute.xlu0 %951
        %v954 = vsel %vm663, %v946, 0
        %v957 = vsel %vm728, %v952, 0
        %959 = vmatprep.subr.bf16.mxu0 0
        %960 = vmatpush1.bf16.msra.mxu0 %v957
        %961 = vmatprep.subr.bf16.mxu0 0
        %962 = vmatpush1.bf16.msra.mxu0 0
        %963 = vmatprep.subr.bf16.mxu0 0
        %964 = vmatpush1.bf16.msra.mxu0 0
        %965 = vmatprep.subr.bf16.mxu0 0
        %966 = vmatpush1.bf16.msra.mxu0 0
        %967 = vmatprep.subr.bf16.mxu0 0
        %968 = vmatpush1.bf16.msra.mxu0 0
        %969 = vmatprep.subr.bf16.mxu0 0
        %970 = vmatpush1.bf16.msra.mxu0 0
        %971 = vmatprep.subr.bf16.mxu0 0
        %972 = vmatpush1.bf16.msra.mxu0 0
        %973 = vmatprep.subr.bf16.mxu0 0
        %974 = vmatpush1.bf16.msra.mxu0 0
        %975 = vmatprep.subr.bf16.mxu0 0
        %976 = vmatpush1.bf16.msra.mxu0 0
        %977 = vmatprep.subr.bf16.mxu0 0
        %978 = vmatpush1.bf16.msra.mxu0 0
        %979 = vmatprep.subr.bf16.mxu0 0
        %980 = vmatpush1.bf16.msra.mxu0 0
        %981 = vmatprep.subr.bf16.mxu0 0
        %982 = vmatpush1.bf16.msra.mxu0 0
        %983 = vmatprep.subr.bf16.mxu0 0
        %984 = vmatpush1.bf16.msra.mxu0 0
        %985 = vmatprep.subr.bf16.mxu0 0
        %986 = vmatpush1.bf16.msra.mxu0 0
        %987 = vmatprep.subr.bf16.mxu0 0
        %988 = vmatpush1.bf16.msra.mxu0 0
        %989 = vmatprep.subr.bf16.mxu0 0
        %990 = vmatpush1.bf16.msra.mxu0 0
        %991 = vmatprep.mubr.bf16.mxu0 0
        %992 = vmatmul.mubr.bf16.gmra.mrb[0].mxu0 %v954
        %v993 = vpop.f32.mrb[0].mxu0
        %v994 = vadd.f32 0.0, %v993
        %v995 = vpop.f32.mrb[0].mxu0
        %v996 = vpop.f32.mrb[0].mxu0
        %v997 = vpop.f32.mrb[0].mxu0
        %998 = vdwg.mxu0
        %v999 = vrcp.pop %v950
        %v1000 = vmul.f32 %v994, %v999
        %v1001 = vpack.c.bf16 %v1000, %v1000
        %1002 = vrot.lane.b32.xlu0 %v661, 104
        %v1003 = vpop.permute.xlu0 %1002
        %1004 = vrot.lane.b32.xlu0 %v662, 104
        %v1005 = vpop.permute.xlu0 %1004
        %v1007 = vsel %vm663, %v1003, 0
        %v1010 = vsel %vm663, %v1005, 0
        %1012 = vmatprep.subr.bf16.mxu0 0
        %1013 = vmatpush1.bf16.xpose.msra.mxu0 %v1010
        %1014 = vmatprep.subr.bf16.mxu0 0
        %1015 = vmatpush1.bf16.xpose.msra.mxu0 0
        %1016 = vmatprep.subr.bf16.mxu0 0
        %1017 = vmatpush1.bf16.xpose.msra.mxu0 0
        %1018 = vmatprep.subr.bf16.mxu0 0
        %1019 = vmatpush1.bf16.xpose.msra.mxu0 0
        %1020 = vmatprep.subr.bf16.mxu0 0
        %1021 = vmatpush1.bf16.xpose.msra.mxu0 0
        %1022 = vmatprep.subr.bf16.mxu0 0
        %1023 = vmatpush1.bf16.xpose.msra.mxu0 0
        %1024 = vmatprep.subr.bf16.mxu0 0
        %1025 = vmatpush1.bf16.xpose.msra.mxu0 0
        %1026 = vmatprep.subr.bf16.mxu0 0
        %1027 = vmatpush1.bf16.xpose.msra.mxu0 0
        %1028 = vmatprep.subr.bf16.mxu0 0
        %1029 = vmatpush1.bf16.xpose.msra.mxu0 0
        %1030 = vmatprep.subr.bf16.mxu0 0
        %1031 = vmatpush1.bf16.xpose.msra.mxu0 0
        %1032 = vmatprep.subr.bf16.mxu0 0
        %1033 = vmatpush1.bf16.xpose.msra.mxu0 0
        %1034 = vmatprep.subr.bf16.mxu0 0
        %1035 = vmatpush1.bf16.xpose.msra.mxu0 0
        %1036 = vmatprep.subr.bf16.mxu0 0
        %1037 = vmatpush1.bf16.xpose.msra.mxu0 0
        %1038 = vmatprep.subr.bf16.mxu0 0
        %1039 = vmatpush1.bf16.xpose.msra.mxu0 0
        %1040 = vmatprep.subr.bf16.mxu0 0
        %1041 = vmatpush1.bf16.xpose.msra.mxu0 0
        %1042 = vmatprep.subr.bf16.mxu0 0
        %1043 = vmatpush1.bf16.xpose.msra.mxu0 0
        %1044 = vmatprep.mubr.bf16.mxu0 0
        %1045 = vmatmul.mubr.bf16.gmra.mrb[0].mxu0 %v1007
        %v1046 = vpop.f32.mrb[0].mxu0
        %v1047 = vadd.f32 0.0, %v1046
        %v1048 = vpop.f32.mrb[0].mxu0
        %v1049 = vpop.f32.mrb[0].mxu0
        %v1050 = vpop.f32.mrb[0].mxu0
        %1051 = vdwg.mxu0
        %v1052 = vsel %vm663, %v1047, -inf
        %1053 = vmax.xlane.f32.xlu0 %v1052
        %v1054 = vpop.xlane.xlu0 %1053
        %v1055 = vsub.f32 %v1047, %v1054
        %v1056 = vpack.c.bf16 %v1055, %v1055
        %v1058 = vmul.bf16 %v1056, 1069105081
        %v1059 = vpow.bf16.pop %v1058
        %v1060 = vunpack.c.l.bf16 %v1059
        %v1061 = vsel %vm663, %v1060, 0.0
        %1062 = vadd.xlane.f32.xlu0 %v1061
        %v1063 = vpop.xlane.xlu0 %1062
        %1064 = vrot.lane.b32.xlu0 %v662, 72
        %v1065 = vpop.permute.xlu0 %1064
        %v1067 = vsel %vm663, %v1059, 0
        %v1070 = vsel %vm728, %v1065, 0
        %1072 = vmatprep.subr.bf16.mxu0 0
        %1073 = vmatpush1.bf16.msra.mxu0 %v1070
        %1074 = vmatprep.subr.bf16.mxu0 0
        %1075 = vmatpush1.bf16.msra.mxu0 0
        %1076 = vmatprep.subr.bf16.mxu0 0
        %1077 = vmatpush1.bf16.msra.mxu0 0
        %1078 = vmatprep.subr.bf16.mxu0 0
        %1079 = vmatpush1.bf16.msra.mxu0 0
        %1080 = vmatprep.subr.bf16.mxu0 0
        %1081 = vmatpush1.bf16.msra.mxu0 0
        %1082 = vmatprep.subr.bf16.mxu0 0
        %1083 = vmatpush1.bf16.msra.mxu0 0
        %1084 = vmatprep.subr.bf16.mxu0 0
        %1085 = vmatpush1.bf16.msra.mxu0 0
        %1086 = vmatprep.subr.bf16.mxu0 0
        %1087 = vmatpush1.bf16.msra.mxu0 0
        %1088 = vmatprep.subr.bf16.mxu0 0
        %1089 = vmatpush1.bf16.msra.mxu0 0
        %1090 = vmatprep.subr.bf16.mxu0 0
        %1091 = vmatpush1.bf16.msra.mxu0 0
        %1092 = vmatprep.subr.bf16.mxu0 0
        %1093 = vmatpush1.bf16.msra.mxu0 0
        %1094 = vmatprep.subr.bf16.mxu0 0
        %1095 = vmatpush1.bf16.msra.mxu0 0
        %1096 = vmatprep.subr.bf16.mxu0 0
        %1097 = vmatpush1.bf16.msra.mxu0 0
        %1098 = vmatprep.subr.bf16.mxu0 0
        %1099 = vmatpush1.bf16.msra.mxu0 0
        %1100 = vmatprep.subr.bf16.mxu0 0
        %1101 = vmatpush1.bf16.msra.mxu0 0
        %1102 = vmatprep.subr.bf16.mxu0 0
        %1103 = vmatpush1.bf16.msra.mxu0 0
        %1104 = vmatprep.mubr.bf16.mxu0 0
        %1105 = vmatmul.mubr.bf16.gmra.mrb[0].mxu0 %v1067
        %v1106 = vpop.f32.mrb[0].mxu0
        %v1107 = vadd.f32 0.0, %v1106
        %v1108 = vpop.f32.mrb[0].mxu0
        %v1109 = vpop.f32.mrb[0].mxu0
        %v1110 = vpop.f32.mrb[0].mxu0
        %1111 = vdwg.mxu0
        %v1112 = vrcp.pop %v1063
        %v1113 = vmul.f32 %v1107, %v1112
        %v1114 = vpack.c.bf16 %v1113, %v1113
        %1116 = vrot.lane.b32.xlu0 %v888, 8
        %v1117 = vpop.permute.xlu0 %1116
        %1119 = vrot.lane.b32.xlu0 %v1001, 16
        %v1120 = vpop.permute.xlu0 %1119
        %1122 = vrot.lane.b32.xlu0 %v1114, 24
        %v1123 = vpop.permute.xlu0 %1122
        %v1126 = vsel %vm663, %v774, %v1117
        %vm1127 = vcmask 130048
        %v1129 = vsel %vm1127, %v1126, %v1120
        %vm1130 = vcmask 195584
        %v1132 = vsel %vm1130, %v1129, %v1123
        %v1133 = vld [vmem:[%s528] sm:$0xf]
        %v1134 = vld [vmem:[%s528 + $0x4] sm:$0xf]
        %v1135 = vld [vmem:[%s528 + $0x8] sm:$0xf]
        %v1136 = vld [vmem:[%s528 + $0xc] sm:$0xf]
        %v1141 = vunpack.c.l.b16 %v1133
        %v1142 = vunpack.c.l.b16 %v1134
        %v1143 = vunpack.c.l.b16 %v1135
        %v1144 = vunpack.c.l.b16 %v1136
        %v1145 = vpack.c.b16 %v1142, %v1141
        %v1146 = vpack.c.b16 %v1144, %v1143
        %v1149 = vsel %vm554, %v1132, 0
        %1151 = vmatprep.subr.bf16.mxu0 0
        %1152 = vmatpush1.bf16.msra.mxu0 %v1145
        %1153 = vmatprep.subr.bf16.mxu0 0
        %1154 = vmatpush1.bf16.msra.mxu0 %v1146
        %1155 = vmatprep.subr.bf16.mxu0 0
        %1156 = vmatpush1.bf16.msra.mxu0 0
        %1157 = vmatprep.subr.bf16.mxu0 0
        %1158 = vmatpush1.bf16.msra.mxu0 0
        %1159 = vmatprep.subr.bf16.mxu0 0
        %1160 = vmatpush1.bf16.msra.mxu0 0
        %1161 = vmatprep.subr.bf16.mxu0 0
        %1162 = vmatpush1.bf16.msra.mxu0 0
        %1163 = vmatprep.subr.bf16.mxu0 0
        %1164 = vmatpush1.bf16.msra.mxu0 0
        %1165 = vmatprep.subr.bf16.mxu0 0
        %1166 = vmatpush1.bf16.msra.mxu0 0
        %1167 = vmatprep.subr.bf16.mxu0 0
        %1168 = vmatpush1.bf16.msra.mxu0 0
        %1169 = vmatprep.subr.bf16.mxu0 0
        %1170 = vmatpush1.bf16.msra.mxu0 0
        %1171 = vmatprep.subr.bf16.mxu0 0
        %1172 = vmatpush1.bf16.msra.mxu0 0
        %1173 = vmatprep.subr.bf16.mxu0 0
        %1174 = vmatpush1.bf16.msra.mxu0 0
        %1175 = vmatprep.subr.bf16.mxu0 0
        %1176 = vmatpush1.bf16.msra.mxu0 0
        %1177 = vmatprep.subr.bf16.mxu0 0
        %1178 = vmatpush1.bf16.msra.mxu0 0
        %1179 = vmatprep.subr.bf16.mxu0 0
        %1180 = vmatpush1.bf16.msra.mxu0 0
        %1181 = vmatprep.subr.bf16.mxu0 0
        %1182 = vmatpush1.bf16.msra.mxu0 0
        %1183 = vmatprep.mubr.bf16.mxu0 0
        %1184 = vmatmul.mubr.bf16.gmra.mrb[0].mxu0 %v1149
        %v1185 = vpop.f32.mrb[0].mxu0
        %v1186 = vadd.f32 0.0, %v1185
        %v1187 = vpop.f32.mrb[0].mxu0
        %v1188 = vpop.f32.mrb[0].mxu0
        %v1189 = vpop.f32.mrb[0].mxu0
        %1190 = vdwg.mxu0
        %v1191 = vld [vmem:[%s448] sm:$0xff]
        %v1192 = vadd.f32 %v1191, %v1186
        %v1193 = vld [vmem:[%s7] sm:$0x1]
        %v1195 = vlaneseq
        %v1196 = vshrl.u32 %v1195, 7
        %v1197 = vsub.s32 0, %v1196
        %v1198 = vrot.slane %v1193, %v1197
        %v1200 = vadd.f32 %v1192, %v1198
        %v1201 = vsel %vm554, %v1200, 0.0
        %1202 = vadd.xlane.f32.xlu0 %v1201
        %v1203 = vpop.xlane.xlu0 %1202
        %v1204 = vrcp.pop 32.0
        %v1205 = vmul.f32 %v1203, %v1204
        %v1206 = vsub.f32 %v1200, %v1205
        %v1207 = vmul.f32 %v1206, %v1206
        %v1208 = vsel %vm554, %v1207, 0.0
        %1209 = vadd.xlane.f32.xlu0 %v1208
        %v1210 = vpop.xlane.xlu0 %1209
        %v1211 = vmul.f32 %v1210, %v1204
        %v1212 = vadd.f32 %v1211, 1e-06
        %v1213 = vrsqrt.pop %v1212
        %v1214 = vmul.f32 %v1206, %v1213
        %v1215 = vld [vmem:[%s8] sm:$0x1]
        %v1217 = vlaneseq
        %v1218 = vshrl.u32 %v1217, 7
        %v1219 = vsub.s32 0, %v1218
        %v1220 = vrot.slane %v1215, %v1219
        %v1222 = vmul.f32 %v1214, %v1220
        %v1223 = vld [vmem:[%s9] sm:$0x1]
        %v1225 = vlaneseq
        %v1226 = vshrl.u32 %v1225, 7
        %v1227 = vsub.s32 0, %v1226
        %v1228 = vrot.slane %v1223, %v1227
        %v1230 = vadd.f32 %v1222, %v1228
        %1231 = vst.msk [vmem:[%s517] sm:$0xff] %vm554, %v1230
        %s1232 = sand.u32 %s307, 1
        %s1233 = scalar_lea.sflag [#allocation5], %s1232
        %s1234 = sand.u32 %s307, 1
        %s1235 = smul.addr %s1234, 8
        %s1236 = scalar_lea.vmem [#allocation11], %s1235
        // Predicated region
        $region77: #{tpu_custom_call.1} parent=59 // pred_check
          %p1237 = pneg %p317
        $region78: #{tpu_custom_call.1} parent=59 // pred_check_branch
          %1239 = sbr.rel (%p1237) target = $region80
        $region79: #{tpu_custom_call.1} parent=59 // pred_region
          %s1241 = ssub.s32 128, 128
          %1242 = vsyncadd %s1233, %s1241
          %s1243 = sadd.s32 %s37, %s36
          %s1244 = smul.addr %s1243, 128
          %s1245 = scalar_lea.hbm %s10, %s1244
          %s1247 = sshll.u32 %s1236, 4
          %s1248 = int_to_ptr.vmem [resolvable:$true] %s1247
          %1250 = dma.vmem_to_hbm [thread:$0]  %s1248, 128, %s1245, %s1233
        $region80: #{tpu_custom_call.1} parent=59 // pred_fallthru
          _
      $region60: #{tpu_custom_call.1} parent=5 // pred_fallthru
        _
      %p1251 = scmp.le.s32.totalorder 2, %s26
      // Predicated region
      $region81: #{tpu_custom_call.1} parent=5 // pred_check
        %p1252 = pneg %p1251
      $region82: #{tpu_custom_call.1} parent=5 // pred_check_branch
        %1254 = sbr.rel (%p1252) target = $region84
      $region83: #{tpu_custom_call.1} parent=5 // pred_region
        %s1255 = ssub.s32 %s26, 2
        // Predicated region
        $region85: #{tpu_custom_call.1} parent=83 // pred_check
          %p1256 = pneg %p323
        $region86: #{tpu_custom_call.1} parent=83 // pred_check_branch
          %1258 = sbr.rel (%p1256) target = $region88
        $region87: #{tpu_custom_call.1} parent=83 // pred_region
          %s1259 = sand.u32 %s308, 1
          %s1260 = scalar_lea.sflag [#allocation5], %s1259
          %s1261 = sand.u32 %s308, 1
          %s1262 = smul.addr %s1261, 8
          %s1263 = scalar_lea.vmem [#allocation11], %s1262
          %1264 = dma.done %s1260, 128
        $region88: #{tpu_custom_call.1} parent=83 // pred_fallthru
          _
      $region84: #{tpu_custom_call.1} parent=5 // pred_fallthru
        _
    $region6: #{tpu_custom_call.1} parent=1 // loop_footer
      %s30 = sadd.s32 1, %s26
    $region7: #{tpu_custom_call.1} parent=1 // loop_footer_branch
      %25 = sbr.rel target = $region3
    $region8: #{tpu_custom_call.1} parent=1 // loop_exit
      _
    %1265 = vsyncpa [#allocation4], 1
    %s1266 = scalar_lea.sflag [#allocation4], 1
    %1267 = vsyncpa %s1266, 1
    %1268 = vsyncpa [#allocation7], 1
    %s1269 = scalar_lea.sflag [#allocation7], 1
    %1270 = vsyncpa %s1269, 1
    %1271 = vsyncpa [#allocation10], 1
    %1272 = vsyncpa [#allocation5], 1
    %s1273 = scalar_lea.sflag [#allocation5], 1
    %1274 = vsyncpa %s1273, 1

</llo_original>
